<compile_context>
chip_gen: v5e
topology: v5e:2x2
jax: 0.10.0
libtpu: 0.0.40
codegen_flags: <defaults>
</compile_context>

<pallas_src>
import functools

import jax
import jax.numpy as jnp
from jax.experimental import pallas as pl
from jax.experimental.pallas import tpu as pltpu


def _round_up(x, m):
    return ((x + m - 1) // m) * m


def _out_size(d, k, s, p, dil):
    return (d + 2 * p - dil * (k - 1) - 1) // s + 1


# ----------------------------- Pallas kernel --------------------------------
def _fused_complex_gemm_kernel(wa_ref, wb_ref, bias_ref, xr_ref, xi_ref, o_ref):
    # Two MXU dots over the same streamed M tile; bias add is a free VPU op
    # under the memory-bound regime.
    acc = jnp.dot(wa_ref[...], xr_ref[...], preferred_element_type=jnp.float32)
    acc = acc + jnp.dot(wb_ref[...], xi_ref[...],
                        preferred_element_type=jnp.float32)
    o_ref[...] = acc + bias_ref[...]          # (2*Cout,1) broadcast over lanes


def _vmem_limit_bytes(C2, K, tm):
    need = 4 * (2 * 2 * K * tm       # xr^T, xi^T tiles, double-buffered
                + 2 * C2 * tm        # output tile, double-buffered
                + 2 * 2 * C2 * K     # resident A / B weight blocks
                + 2 * C2)            # bias column
    return int(min(max(2 * need, 16 << 20), 32 << 20))


def _fused_complex_gemm(w_a, w_b, bias, xrT, xiT, *, tm):
    """w_a/w_b: (2*Cout, K); bias: (2*Cout, 1); xrT/xiT: (K, Mp), Mp % tm == 0."""
    C2, K = w_a.shape
    Mp = xrT.shape[1]
    grid = (Mp // tm,)
    # TODO(synk): if DMA is still exposed at very large M, set
    # pipeline_mode=pl.Buffered(3) on the two streamed X BlockSpecs.
    return pl.pallas_call(
        _fused_complex_gemm_kernel,
        out_shape=jax.ShapeDtypeStruct((C2, Mp), jnp.float32),
        grid_spec=pltpu.PrefetchScalarGridSpec(
            num_scalar_prefetch=0,
            grid=grid,
            in_specs=[
                pl.BlockSpec((C2, K), lambda i: (0, 0)),   # A  (tiny, resident)
                pl.BlockSpec((C2, K), lambda i: (0, 0)),   # B  (tiny, resident)
                pl.BlockSpec((C2, 1), lambda i: (0, 0)),   # bias column
                pl.BlockSpec((K, tm), lambda i: (0, i)),   # xr^T streamed over M
                pl.BlockSpec((K, tm), lambda i: (0, i)),   # xi^T streamed over M
            ],
            out_specs=pl.BlockSpec((C2, tm), lambda i: (0, i)),
        ),
        compiler_params=pltpu.CompilerParams(
            dimension_semantics=("parallel",),
            vmem_limit_bytes=_vmem_limit_bytes(C2, K, tm)),
    )(w_a, w_b, bias, xrT, xiT)


# ------------------------------ glue (im2col) --------------------------------
def _im2col_3d_T(xp, ksize, out_sizes, stride, dilation):
    """xp: channel-leading *padded* input (C, N, Dp, Hp, Wp).

    Returns the transposed im2col matrix (C*KD*KH*KW, N*OD*OH*OW).  The K axis
    is ordered (c, id, ih, iw) row-major, matching weight.reshape(Cout, -1).
    """
    C, N = xp.shape[0], xp.shape[1]
    kd, kh, kw = ksize
    OD, OH, OW = out_sizes
    sd, sh, sw = stride
    dd, dh, dw = dilation
    cols = []
    for id_ in range(kd):
        for ih in range(kh):
            for iw in range(kw):
                cols.append(xp[:, :,
                               id_ * dd: id_ * dd + sd * (OD - 1) + 1: sd,
                               ih * dh: ih * dh + sh * (OH - 1) + 1: sh,
                               iw * dw: iw * dw + sw * (OW - 1) + 1: sw])
    col = jnp.stack(cols, axis=1)                      # (C, Kt, N, OD, OH, OW)
    return col.reshape(C * kd * kh * kw, N * OD * OH * OW)


# --------------------------- module forward pass -----------------------------
def complex_conv_ktUnder_CAIPI_3_forward(complex_input, params, *, stride,
                                         padding, dilation, groups=1):
    """Faithful single-forward port of complex_conv_ktUnder_CAIPI_3.forward."""
    assert groups == 1  # TODO(synk): grouped Conv3d not implemented in the GEMM lowering.
    wr = params["real_weight"] * params["mask_kernel"]   # weight.data * mask_kernel
    wi = params["imag_weight"] * params["mask_kernel"]
    br = params["real_bias"]
    bi = params["imag_bias"]

    Cout, Cin, kd, kh, kw = wr.shape
    pd, ph, pw = padding
    N, _, D, H, W = complex_input.shape
    OD = _out_size(D, kd, stride[0], pd, dilation[0])
    OH = _out_size(H, kh, stride[1], ph, dilation[1])
    OW = _out_size(W, kw, stride[2], pw, dilation[2])

    # Channel-leading transpose of the 1x input, then spatial zero-pad, *before*
    # patch extraction -> the duplicated im2col matrix is materialized once.
    def prep(x):
        x = jnp.transpose(x, (1, 0, 2, 3, 4)).astype(jnp.float32)
        return jnp.pad(x, ((0, 0), (0, 0), (pd, pd), (ph, ph), (pw, pw)))

    xr = prep(jnp.real(complex_input))
    xi = prep(jnp.imag(complex_input))

    # TODO(synk): im2col still duplicates X by kd*kh*kw in HBM; fully fusing the
    # patch gather into the kernel (tap-accumulation grid + manual DMA of
    # shifted windows) would cut HBM traffic by another ~27x, biggest on v5e.
    xrT = _im2col_3d_T(xr, (kd, kh, kw), (OD, OH, OW), stride, dilation)
    xiT = _im2col_3d_T(xi, (kd, kh, kw), (OD, OH, OW), stride, dilation)

    K = Cin * kd * kh * kw
    M = N * OD * OH * OW
    C2 = 2 * Cout

    # Block-stacked weights: rows 0..Cout-1 -> real output, Cout.. -> imag.
    #   real = Wr@xr - Wi@xi + (br-bi),   imag = Wi@xr + Wr@xi + (br+bi)
    wrm = wr.reshape(Cout, K).astype(jnp.float32)
    wim = wi.reshape(Cout, K).astype(jnp.float32)
    w_a = jnp.concatenate([wrm, wim], axis=0)            # multiplies xr^T
    w_b = jnp.concatenate([-wim, wrm], axis=0)           # multiplies xi^T
    bias = jnp.concatenate([br - bi, br + bi]).reshape(C2, 1).astype(jnp.float32)
    # TODO(synk): optionally narrow w_a/w_b and the streamed xr^T/xi^T to bf16
    # (f32 accumulation kept) for ~2x HBM-roofline gain if ~1e-3 accuracy is ok.

    # M tiling: lane-dense tiles (~2048 lanes target), even tile count so both
    # v7x TensorCores get work on the 'parallel' axis.
    LANE_TARGET = 2048
    num_tiles = max(1, M // LANE_TARGET)
    if num_tiles % 2 and (num_tiles > 1 or M >= 256):
        num_tiles += 1
    tm = _round_up(-(-M // num_tiles), 128)
    Mp = num_tiles * tm
    if Mp > M:
        xrT = jnp.pad(xrT, ((0, 0), (0, Mp - M)))
        xiT = jnp.pad(xiT, ((0, 0), (0, Mp - M)))

    out_t = _fused_complex_gemm(w_a, w_b, bias, xrT, xiT, tm=tm)   # (C2, Mp)

    # Output relayout back to NCDHW (small vs. X traffic; revisit if Cout grows).
    out_r = out_t[:Cout, :M].reshape(Cout, N, OD, OH, OW).transpose(1, 0, 2, 3, 4)
    out_i = out_t[Cout:, :M].reshape(Cout, N, OD, OH, OW).transpose(1, 0, 2, 3, 4)
    return jax.lax.complex(out_r, out_i)


# --------------------------------- main --------------------------------------
if __name__ == "__main__":
    # Module hyper-parameters (small, consistent with a complex Conv3d layer).
    in_channels, out_channels = 4, 8
    kernel_size = (3, 3, 3)
    stride = (1, 1, 1)
    padding = (1, 1, 1)
    dilation = (1, 1, 1)
    groups = 1
    N, D, H, W = 2, 6, 8, 8

    key = jax.random.PRNGKey(0)
    k_wr, k_wi, k_br, k_bi, k_x, k_xi = jax.random.split(key, 6)

    params = {
        "real_weight": 0.1 * jax.random.normal(
            k_wr, (out_channels, in_channels) + kernel_size, jnp.float32),
        "imag_weight": 0.1 * jax.random.normal(
            k_wi, (out_channels, in_channels) + kernel_size, jnp.float32),
        "real_bias": 0.1 * jax.random.normal(k_br, (out_channels,), jnp.float32),
        "imag_bias": 0.1 * jax.random.normal(k_bi, (out_channels,), jnp.float32),
        # mask_kernel: deterministic 0/1 pattern over the taps (broadcasts over O,I)
        "mask_kernel": (jnp.arange(kernel_size[0] * kernel_size[1] * kernel_size[2])
                        .reshape(kernel_size) % 2).astype(jnp.float32),
    }

    xr_in = jax.random.normal(k_x, (N, in_channels, D, H, W), jnp.float32)
    xi_in = jax.random.normal(k_xi, (N, in_channels, D, H, W), jnp.float32)
    complex_input = jax.lax.complex(xr_in, xi_in)

    fwd = jax.jit(functools.partial(
        complex_conv_ktUnder_CAIPI_3_forward,
        stride=stride, padding=padding, dilation=dilation, groups=groups))
    out = fwd(complex_input, params)
    jax.block_until_ready(out)

    # Reference check against XLA conv (real/imag parts separately).
    def ref_conv(x, w, b):
        y = jax.lax.conv_general_dilated(
            x, w, window_strides=stride,
            padding=[(p, p) for p in padding],
            rhs_dilation=dilation,
            dimension_numbers=("NCDHW", "OIDHW", "NCDHW"))
        return y + b.reshape(1, -1, 1, 1, 1)

    wr_m = params["real_weight"] * params["mask_kernel"]
    wi_m = params["imag_weight"] * params["mask_kernel"]
    rr = ref_conv(xr_in, wr_m, params["real_bias"])
    ri = ref_conv(xi_in, wr_m, params["real_bias"])
    ir = ref_conv(xr_in, wi_m, params["imag_bias"])
    ii = ref_conv(xi_in, wi_m, params["imag_bias"])
    ref = jax.lax.complex(rr - ii, ri + ir)

    assert out.shape == ref.shape and out.dtype == jnp.complex64
    assert jnp.allclose(jnp.real(out), jnp.real(ref), atol=1e-4, rtol=1e-4)
    assert jnp.allclose(jnp.imag(out), jnp.imag(ref), atol=1e-4, rtol=1e-4)
    print("KERNEL_OK")
</pallas_src>

<mosaic_0001>
module attributes {stable_mosaic.version = 11 : i64} {
  func.func @_fused_complex_gemm_kernel(%arg0: i32, %arg1: memref<16x108xf32, #tpu.memory_space<vmem>>, %arg2: memref<16x108xf32, #tpu.memory_space<vmem>>, %arg3: memref<16x1xf32, #tpu.memory_space<vmem>>, %arg4: memref<108x384xf32, #tpu.memory_space<vmem>>, %arg5: memref<108x384xf32, #tpu.memory_space<vmem>>, %arg6: memref<16x384xf32, #tpu.memory_space<vmem>>) attributes {dimension_semantics = [#tpu.dimension_semantics<parallel>], iteration_bounds = array<i64: 2>, scalar_prefetch = 0 : i64, scratch_operands = 0 : i64, tpu.core_type = #tpu.core_type<tc>, window_params = [{pipeline_mode = #tpu.pipeline_mode<synchronous>, transform_indices = @transform_0, window_bounds = array<i64: 16, 108>}, {pipeline_mode = #tpu.pipeline_mode<synchronous>, transform_indices = @transform_1, window_bounds = array<i64: 16, 108>}, {pipeline_mode = #tpu.pipeline_mode<synchronous>, transform_indices = @transform_2, window_bounds = array<i64: 16, 1>}, {transform_indices = @transform_3, window_bounds = array<i64: 108, 384>}, {transform_indices = @transform_4, window_bounds = array<i64: 108, 384>}, {transform_indices = @transform_5, window_bounds = array<i64: 16, 384>}]} {
    %c0 = arith.constant 0 : index
    %c0_0 = arith.constant 0 : index
    %0 = vector.load %arg1[%c0, %c0_0] : memref<16x108xf32, #tpu.memory_space<vmem>>, vector<16x108xf32>
    %c0_1 = arith.constant 0 : index
    %c0_2 = arith.constant 0 : index
    %1 = vector.load %arg4[%c0_1, %c0_2] : memref<108x384xf32, #tpu.memory_space<vmem>>, vector<108x384xf32>
    %cst = arith.constant dense<0.000000e+00> : vector<16x384xf32>
    %2 = tpu.matmul %0, %1, %cst {dimension_numbers = #tpu.dot_dimension_numbers<[1], [0], [0], [1], [0, 0, 1, 1], [], []>} : vector<16x108xf32>, vector<108x384xf32>, vector<16x384xf32> -> vector<16x384xf32>
    %c0_3 = arith.constant 0 : index
    %c0_4 = arith.constant 0 : index
    %3 = vector.load %arg2[%c0_3, %c0_4] : memref<16x108xf32, #tpu.memory_space<vmem>>, vector<16x108xf32>
    %c0_5 = arith.constant 0 : index
    %c0_6 = arith.constant 0 : index
    %4 = vector.load %arg5[%c0_5, %c0_6] : memref<108x384xf32, #tpu.memory_space<vmem>>, vector<108x384xf32>
    %cst_7 = arith.constant dense<0.000000e+00> : vector<16x384xf32>
    %5 = tpu.matmul %3, %4, %cst_7 {dimension_numbers = #tpu.dot_dimension_numbers<[1], [0], [0], [1], [0, 0, 1, 1], [], []>} : vector<16x108xf32>, vector<108x384xf32>, vector<16x384xf32> -> vector<16x384xf32>
    %6 = arith.addf %2, %5 : vector<16x384xf32>
    %c0_8 = arith.constant 0 : index
    %c0_9 = arith.constant 0 : index
    %7 = vector.load %arg3[%c0_8, %c0_9] : memref<16x1xf32, #tpu.memory_space<vmem>>, vector<16x1xf32>
    %8 = vector.broadcast %7 : vector<16x1xf32> to vector<16x384xf32>
    %9 = arith.addf %6, %8 : vector<16x384xf32>
    %c0_10 = arith.constant 0 : index
    %c0_11 = arith.constant 0 : index
    %10 = vector.load %arg6[%c0_10, %c0_11] : memref<16x384xf32, #tpu.memory_space<vmem>>, vector<16x384xf32>
    tpu.vector_store %arg6[%c0_10, %c0_11], %9 {strides = array<i32>} : memref<16x384xf32, #tpu.memory_space<vmem>>, vector<16x384xf32>,
    return
  }
  func.func @transform_0(%arg0: i32) -> (i32, i32) {
    %c0_i32 = arith.constant 0 : i32
    %c0_i32_0 = arith.constant 0 : i32
    %c0_i32_1 = arith.constant 0 : i32
    return %c0_i32, %c0_i32_0 : i32, i32
  }
  func.func @transform_1(%arg0: i32) -> (i32, i32) {
    %c0_i32 = arith.constant 0 : i32
    %c0_i32_0 = arith.constant 0 : i32
    %c0_i32_1 = arith.constant 0 : i32
    return %c0_i32, %c0_i32_0 : i32, i32
  }
  func.func @transform_2(%arg0: i32) -> (i32, i32) {
    %c0_i32 = arith.constant 0 : i32
    %c0_i32_0 = arith.constant 0 : i32
    %c0_i32_1 = arith.constant 0 : i32
    return %c0_i32, %c0_i32_0 : i32, i32
  }
  func.func @transform_3(%arg0: i32) -> (i32, i32) {
    %c0_i32 = arith.constant 0 : i32
    %c0_i32_0 = arith.constant 0 : i32
    return %c0_i32, %arg0 : i32, i32
  }
  func.func @transform_4(%arg0: i32) -> (i32, i32) {
    %c0_i32 = arith.constant 0 : i32
    %c0_i32_0 = arith.constant 0 : i32
    return %c0_i32, %arg0 : i32, i32
  }
  func.func @transform_5(%arg0: i32) -> (i32, i32) {
    %c0_i32 = arith.constant 0 : i32
    %c0_i32_0 = arith.constant 0 : i32
    return %c0_i32, %arg0 : i32, i32
  }
}

</mosaic_0001>

<llo_original>
// kernel: neg.1
$region0: #{neg.1}
  #allocation0 [shape = 's32[1]{0}', space=sflag, size = 0x4, scoped, tag = 'scoped memory for neg.1']
  %s0 = inlined_call_operand.vmem [shape: f32[8,108], index: 0, kind: input, shape index: {}]
  %s1 = inlined_call_operand.vmem [shape: f32[8,108], index: 1, kind: output, shape index: {}]
  %v2 = vld [vmem:[%s0] sm:$0xff]
  %3 = xla_tuple %v2
  %4 = xla_tuple %3
  %v5 = vxor.u32 %v2, 2147483648
  %6 = xla_tuple %v5
  %7 = vst [vmem:[%s1] sm:$0xff] %v5

// kernel: custom-call.1
$region0: #{custom-call.1}
  %s0 = inlined_call_operand.vmem [shape: c64[2,4,6,8,8], index: 0, kind: input, shape index: {}]
  %s1 = inlined_call_operand.vmem [shape: f32[2,4,6,8,8], index: 1, kind: output, shape index: {}]
  %s2 = scalar_lea.vmem %s0, 384
  %v3 = vld [vmem:[%s2] sm:$0xff]
  %4 = vst [vmem:[%s1] sm:$0xff] %v3
  %s5 = scalar_lea.vmem %s1, 8
  %s6 = scalar_lea.vmem %s2, 8
  %v7 = vld [vmem:[%s6] sm:$0xff]
  %8 = vst [vmem:[%s5] sm:$0xff] %v7
  %s9 = scalar_lea.vmem %s1, 16
  %s10 = scalar_lea.vmem %s2, 16
  %v11 = vld [vmem:[%s10] sm:$0xff]
  %12 = vst [vmem:[%s9] sm:$0xff] %v11
  %s13 = scalar_lea.vmem %s1, 24
  %s14 = scalar_lea.vmem %s2, 24
  %v15 = vld [vmem:[%s14] sm:$0xff]
  %16 = vst [vmem:[%s13] sm:$0xff] %v15
  %s17 = scalar_lea.vmem %s1, 32
  %s18 = scalar_lea.vmem %s2, 32
  %v19 = vld [vmem:[%s18] sm:$0xff]
  %20 = vst [vmem:[%s17] sm:$0xff] %v19
  %s21 = scalar_lea.vmem %s1, 40
  %s22 = scalar_lea.vmem %s2, 40
  %v23 = vld [vmem:[%s22] sm:$0xff]
  %24 = vst [vmem:[%s21] sm:$0xff] %v23
  %s25 = scalar_lea.vmem %s1, 48
  %s26 = scalar_lea.vmem %s2, 48
  %v27 = vld [vmem:[%s26] sm:$0xff]
  %28 = vst [vmem:[%s25] sm:$0xff] %v27
  %s29 = scalar_lea.vmem %s1, 56
  %s30 = scalar_lea.vmem %s2, 56
  %v31 = vld [vmem:[%s30] sm:$0xff]
  %32 = vst [vmem:[%s29] sm:$0xff] %v31
  %s33 = scalar_lea.vmem %s1, 64
  %s34 = scalar_lea.vmem %s2, 64
  %v35 = vld [vmem:[%s34] sm:$0xff]
  %36 = vst [vmem:[%s33] sm:$0xff] %v35
  %s37 = scalar_lea.vmem %s1, 72
  %s38 = scalar_lea.vmem %s2, 72
  %v39 = vld [vmem:[%s38] sm:$0xff]
  %40 = vst [vmem:[%s37] sm:$0xff] %v39
  %s41 = scalar_lea.vmem %s1, 80
  %s42 = scalar_lea.vmem %s2, 80
  %v43 = vld [vmem:[%s42] sm:$0xff]
  %44 = vst [vmem:[%s41] sm:$0xff] %v43
  %s45 = scalar_lea.vmem %s1, 88
  %s46 = scalar_lea.vmem %s2, 88
  %v47 = vld [vmem:[%s46] sm:$0xff]
  %48 = vst [vmem:[%s45] sm:$0xff] %v47
  %s49 = scalar_lea.vmem %s1, 96
  %s50 = scalar_lea.vmem %s2, 96
  %v51 = vld [vmem:[%s50] sm:$0xff]
  %52 = vst [vmem:[%s49] sm:$0xff] %v51
  %s53 = scalar_lea.vmem %s1, 104
  %s54 = scalar_lea.vmem %s2, 104
  %v55 = vld [vmem:[%s54] sm:$0xff]
  %56 = vst [vmem:[%s53] sm:$0xff] %v55
  %s57 = scalar_lea.vmem %s1, 112
  %s58 = scalar_lea.vmem %s2, 112
  %v59 = vld [vmem:[%s58] sm:$0xff]
  %60 = vst [vmem:[%s57] sm:$0xff] %v59
  %s61 = scalar_lea.vmem %s1, 120
  %s62 = scalar_lea.vmem %s2, 120
  %v63 = vld [vmem:[%s62] sm:$0xff]
  %64 = vst [vmem:[%s61] sm:$0xff] %v63
  %s65 = scalar_lea.vmem %s1, 128
  %s66 = scalar_lea.vmem %s2, 128
  %v67 = vld [vmem:[%s66] sm:$0xff]
  %68 = vst [vmem:[%s65] sm:$0xff] %v67
  %s69 = scalar_lea.vmem %s1, 136
  %s70 = scalar_lea.vmem %s2, 136
  %v71 = vld [vmem:[%s70] sm:$0xff]
  %72 = vst [vmem:[%s69] sm:$0xff] %v71
  %s73 = scalar_lea.vmem %s1, 144
  %s74 = scalar_lea.vmem %s2, 144
  %v75 = vld [vmem:[%s74] sm:$0xff]
  %76 = vst [vmem:[%s73] sm:$0xff] %v75
  %s77 = scalar_lea.vmem %s1, 152
  %s78 = scalar_lea.vmem %s2, 152
  %v79 = vld [vmem:[%s78] sm:$0xff]
  %80 = vst [vmem:[%s77] sm:$0xff] %v79
  %s81 = scalar_lea.vmem %s1, 160
  %s82 = scalar_lea.vmem %s2, 160
  %v83 = vld [vmem:[%s82] sm:$0xff]
  %84 = vst [vmem:[%s81] sm:$0xff] %v83
  %s85 = scalar_lea.vmem %s1, 168
  %s86 = scalar_lea.vmem %s2, 168
  %v87 = vld [vmem:[%s86] sm:$0xff]
  %88 = vst [vmem:[%s85] sm:$0xff] %v87
  %s89 = scalar_lea.vmem %s1, 176
  %s90 = scalar_lea.vmem %s2, 176
  %v91 = vld [vmem:[%s90] sm:$0xff]
  %92 = vst [vmem:[%s89] sm:$0xff] %v91
  %s93 = scalar_lea.vmem %s1, 184
  %s94 = scalar_lea.vmem %s2, 184
  %v95 = vld [vmem:[%s94] sm:$0xff]
  %96 = vst [vmem:[%s93] sm:$0xff] %v95
  %s97 = scalar_lea.vmem %s1, 192
  %s98 = scalar_lea.vmem %s2, 192
  %v99 = vld [vmem:[%s98] sm:$0xff]
  %100 = vst [vmem:[%s97] sm:$0xff] %v99
  %s101 = scalar_lea.vmem %s1, 200
  %s102 = scalar_lea.vmem %s2, 200
  %v103 = vld [vmem:[%s102] sm:$0xff]
  %104 = vst [vmem:[%s101] sm:$0xff] %v103
  %s105 = scalar_lea.vmem %s1, 208
  %s106 = scalar_lea.vmem %s2, 208
  %v107 = vld [vmem:[%s106] sm:$0xff]
  %108 = vst [vmem:[%s105] sm:$0xff] %v107
  %s109 = scalar_lea.vmem %s1, 216
  %s110 = scalar_lea.vmem %s2, 216
  %v111 = vld [vmem:[%s110] sm:$0xff]
  %112 = vst [vmem:[%s109] sm:$0xff] %v111
  %s113 = scalar_lea.vmem %s1, 224
  %s114 = scalar_lea.vmem %s2, 224
  %v115 = vld [vmem:[%s114] sm:$0xff]
  %116 = vst [vmem:[%s113] sm:$0xff] %v115
  %s117 = scalar_lea.vmem %s1, 232
  %s118 = scalar_lea.vmem %s2, 232
  %v119 = vld [vmem:[%s118] sm:$0xff]
  %120 = vst [vmem:[%s117] sm:$0xff] %v119
  %s121 = scalar_lea.vmem %s1, 240
  %s122 = scalar_lea.vmem %s2, 240
  %v123 = vld [vmem:[%s122] sm:$0xff]
  %124 = vst [vmem:[%s121] sm:$0xff] %v123
  %s125 = scalar_lea.vmem %s1, 248
  %s126 = scalar_lea.vmem %s2, 248
  %v127 = vld [vmem:[%s126] sm:$0xff]
  %128 = vst [vmem:[%s125] sm:$0xff] %v127
  %s129 = scalar_lea.vmem %s1, 256
  %s130 = scalar_lea.vmem %s2, 256
  %v131 = vld [vmem:[%s130] sm:$0xff]
  %132 = vst [vmem:[%s129] sm:$0xff] %v131
  %s133 = scalar_lea.vmem %s1, 264
  %s134 = scalar_lea.vmem %s2, 264
  %v135 = vld [vmem:[%s134] sm:$0xff]
  %136 = vst [vmem:[%s133] sm:$0xff] %v135
  %s137 = scalar_lea.vmem %s1, 272
  %s138 = scalar_lea.vmem %s2, 272
  %v139 = vld [vmem:[%s138] sm:$0xff]
  %140 = vst [vmem:[%s137] sm:$0xff] %v139
  %s141 = scalar_lea.vmem %s1, 280
  %s142 = scalar_lea.vmem %s2, 280
  %v143 = vld [vmem:[%s142] sm:$0xff]
  %144 = vst [vmem:[%s141] sm:$0xff] %v143
  %s145 = scalar_lea.vmem %s1, 288
  %s146 = scalar_lea.vmem %s2, 288
  %v147 = vld [vmem:[%s146] sm:$0xff]
  %148 = vst [vmem:[%s145] sm:$0xff] %v147
  %s149 = scalar_lea.vmem %s1, 296
  %s150 = scalar_lea.vmem %s2, 296
  %v151 = vld [vmem:[%s150] sm:$0xff]
  %152 = vst [vmem:[%s149] sm:$0xff] %v151
  %s153 = scalar_lea.vmem %s1, 304
  %s154 = scalar_lea.vmem %s2, 304
  %v155 = vld [vmem:[%s154] sm:$0xff]
  %156 = vst [vmem:[%s153] sm:$0xff] %v155
  %s157 = scalar_lea.vmem %s1, 312
  %s158 = scalar_lea.vmem %s2, 312
  %v159 = vld [vmem:[%s158] sm:$0xff]
  %160 = vst [vmem:[%s157] sm:$0xff] %v159
  %s161 = scalar_lea.vmem %s1, 320
  %s162 = scalar_lea.vmem %s2, 320
  %v163 = vld [vmem:[%s162] sm:$0xff]
  %164 = vst [vmem:[%s161] sm:$0xff] %v163
  %s165 = scalar_lea.vmem %s1, 328
  %s166 = scalar_lea.vmem %s2, 328
  %v167 = vld [vmem:[%s166] sm:$0xff]
  %168 = vst [vmem:[%s165] sm:$0xff] %v167
  %s169 = scalar_lea.vmem %s1, 336
  %s170 = scalar_lea.vmem %s2, 336
  %v171 = vld [vmem:[%s170] sm:$0xff]
  %172 = vst [vmem:[%s169] sm:$0xff] %v171
  %s173 = scalar_lea.vmem %s1, 344
  %s174 = scalar_lea.vmem %s2, 344
  %v175 = vld [vmem:[%s174] sm:$0xff]
  %176 = vst [vmem:[%s173] sm:$0xff] %v175
  %s177 = scalar_lea.vmem %s1, 352
  %s178 = scalar_lea.vmem %s2, 352
  %v179 = vld [vmem:[%s178] sm:$0xff]
  %180 = vst [vmem:[%s177] sm:$0xff] %v179
  %s181 = scalar_lea.vmem %s1, 360
  %s182 = scalar_lea.vmem %s2, 360
  %v183 = vld [vmem:[%s182] sm:$0xff]
  %184 = vst [vmem:[%s181] sm:$0xff] %v183
  %s185 = scalar_lea.vmem %s1, 368
  %s186 = scalar_lea.vmem %s2, 368
  %v187 = vld [vmem:[%s186] sm:$0xff]
  %188 = vst [vmem:[%s185] sm:$0xff] %v187
  %s189 = scalar_lea.vmem %s1, 376
  %s190 = scalar_lea.vmem %s2, 376
  %v191 = vld [vmem:[%s190] sm:$0xff]
  %192 = vst [vmem:[%s189] sm:$0xff] %v191

// kernel: custom-call
$region0: #{custom-call}
  %s0 = inlined_call_operand.vmem [shape: c64[2,4,6,8,8], index: 0, kind: input, shape index: {}]
  %s1 = inlined_call_operand.vmem [shape: f32[2,4,6,8,8], index: 1, kind: output, shape index: {}]
  %v2 = vld [vmem:[%s0] sm:$0xff]
  %3 = vst [vmem:[%s1] sm:$0xff] %v2
  %s4 = scalar_lea.vmem %s1, 8
  %s5 = scalar_lea.vmem %s0, 8
  %v6 = vld [vmem:[%s5] sm:$0xff]
  %7 = vst [vmem:[%s4] sm:$0xff] %v6
  %s8 = scalar_lea.vmem %s1, 16
  %s9 = scalar_lea.vmem %s0, 16
  %v10 = vld [vmem:[%s9] sm:$0xff]
  %11 = vst [vmem:[%s8] sm:$0xff] %v10
  %s12 = scalar_lea.vmem %s1, 24
  %s13 = scalar_lea.vmem %s0, 24
  %v14 = vld [vmem:[%s13] sm:$0xff]
  %15 = vst [vmem:[%s12] sm:$0xff] %v14
  %s16 = scalar_lea.vmem %s1, 32
  %s17 = scalar_lea.vmem %s0, 32
  %v18 = vld [vmem:[%s17] sm:$0xff]
  %19 = vst [vmem:[%s16] sm:$0xff] %v18
  %s20 = scalar_lea.vmem %s1, 40
  %s21 = scalar_lea.vmem %s0, 40
  %v22 = vld [vmem:[%s21] sm:$0xff]
  %23 = vst [vmem:[%s20] sm:$0xff] %v22
  %s24 = scalar_lea.vmem %s1, 48
  %s25 = scalar_lea.vmem %s0, 48
  %v26 = vld [vmem:[%s25] sm:$0xff]
  %27 = vst [vmem:[%s24] sm:$0xff] %v26
  %s28 = scalar_lea.vmem %s1, 56
  %s29 = scalar_lea.vmem %s0, 56
  %v30 = vld [vmem:[%s29] sm:$0xff]
  %31 = vst [vmem:[%s28] sm:$0xff] %v30
  %s32 = scalar_lea.vmem %s1, 64
  %s33 = scalar_lea.vmem %s0, 64
  %v34 = vld [vmem:[%s33] sm:$0xff]
  %35 = vst [vmem:[%s32] sm:$0xff] %v34
  %s36 = scalar_lea.vmem %s1, 72
  %s37 = scalar_lea.vmem %s0, 72
  %v38 = vld [vmem:[%s37] sm:$0xff]
  %39 = vst [vmem:[%s36] sm:$0xff] %v38
  %s40 = scalar_lea.vmem %s1, 80
  %s41 = scalar_lea.vmem %s0, 80
  %v42 = vld [vmem:[%s41] sm:$0xff]
  %43 = vst [vmem:[%s40] sm:$0xff] %v42
  %s44 = scalar_lea.vmem %s1, 88
  %s45 = scalar_lea.vmem %s0, 88
  %v46 = vld [vmem:[%s45] sm:$0xff]
  %47 = vst [vmem:[%s44] sm:$0xff] %v46
  %s48 = scalar_lea.vmem %s1, 96
  %s49 = scalar_lea.vmem %s0, 96
  %v50 = vld [vmem:[%s49] sm:$0xff]
  %51 = vst [vmem:[%s48] sm:$0xff] %v50
  %s52 = scalar_lea.vmem %s1, 104
  %s53 = scalar_lea.vmem %s0, 104
  %v54 = vld [vmem:[%s53] sm:$0xff]
  %55 = vst [vmem:[%s52] sm:$0xff] %v54
  %s56 = scalar_lea.vmem %s1, 112
  %s57 = scalar_lea.vmem %s0, 112
  %v58 = vld [vmem:[%s57] sm:$0xff]
  %59 = vst [vmem:[%s56] sm:$0xff] %v58
  %s60 = scalar_lea.vmem %s1, 120
  %s61 = scalar_lea.vmem %s0, 120
  %v62 = vld [vmem:[%s61] sm:$0xff]
  %63 = vst [vmem:[%s60] sm:$0xff] %v62
  %s64 = scalar_lea.vmem %s1, 128
  %s65 = scalar_lea.vmem %s0, 128
  %v66 = vld [vmem:[%s65] sm:$0xff]
  %67 = vst [vmem:[%s64] sm:$0xff] %v66
  %s68 = scalar_lea.vmem %s1, 136
  %s69 = scalar_lea.vmem %s0, 136
  %v70 = vld [vmem:[%s69] sm:$0xff]
  %71 = vst [vmem:[%s68] sm:$0xff] %v70
  %s72 = scalar_lea.vmem %s1, 144
  %s73 = scalar_lea.vmem %s0, 144
  %v74 = vld [vmem:[%s73] sm:$0xff]
  %75 = vst [vmem:[%s72] sm:$0xff] %v74
  %s76 = scalar_lea.vmem %s1, 152
  %s77 = scalar_lea.vmem %s0, 152
  %v78 = vld [vmem:[%s77] sm:$0xff]
  %79 = vst [vmem:[%s76] sm:$0xff] %v78
  %s80 = scalar_lea.vmem %s1, 160
  %s81 = scalar_lea.vmem %s0, 160
  %v82 = vld [vmem:[%s81] sm:$0xff]
  %83 = vst [vmem:[%s80] sm:$0xff] %v82
  %s84 = scalar_lea.vmem %s1, 168
  %s85 = scalar_lea.vmem %s0, 168
  %v86 = vld [vmem:[%s85] sm:$0xff]
  %87 = vst [vmem:[%s84] sm:$0xff] %v86
  %s88 = scalar_lea.vmem %s1, 176
  %s89 = scalar_lea.vmem %s0, 176
  %v90 = vld [vmem:[%s89] sm:$0xff]
  %91 = vst [vmem:[%s88] sm:$0xff] %v90
  %s92 = scalar_lea.vmem %s1, 184
  %s93 = scalar_lea.vmem %s0, 184
  %v94 = vld [vmem:[%s93] sm:$0xff]
  %95 = vst [vmem:[%s92] sm:$0xff] %v94
  %s96 = scalar_lea.vmem %s1, 192
  %s97 = scalar_lea.vmem %s0, 192
  %v98 = vld [vmem:[%s97] sm:$0xff]
  %99 = vst [vmem:[%s96] sm:$0xff] %v98
  %s100 = scalar_lea.vmem %s1, 200
  %s101 = scalar_lea.vmem %s0, 200
  %v102 = vld [vmem:[%s101] sm:$0xff]
  %103 = vst [vmem:[%s100] sm:$0xff] %v102
  %s104 = scalar_lea.vmem %s1, 208
  %s105 = scalar_lea.vmem %s0, 208
  %v106 = vld [vmem:[%s105] sm:$0xff]
  %107 = vst [vmem:[%s104] sm:$0xff] %v106
  %s108 = scalar_lea.vmem %s1, 216
  %s109 = scalar_lea.vmem %s0, 216
  %v110 = vld [vmem:[%s109] sm:$0xff]
  %111 = vst [vmem:[%s108] sm:$0xff] %v110
  %s112 = scalar_lea.vmem %s1, 224
  %s113 = scalar_lea.vmem %s0, 224
  %v114 = vld [vmem:[%s113] sm:$0xff]
  %115 = vst [vmem:[%s112] sm:$0xff] %v114
  %s116 = scalar_lea.vmem %s1, 232
  %s117 = scalar_lea.vmem %s0, 232
  %v118 = vld [vmem:[%s117] sm:$0xff]
  %119 = vst [vmem:[%s116] sm:$0xff] %v118
  %s120 = scalar_lea.vmem %s1, 240
  %s121 = scalar_lea.vmem %s0, 240
  %v122 = vld [vmem:[%s121] sm:$0xff]
  %123 = vst [vmem:[%s120] sm:$0xff] %v122
  %s124 = scalar_lea.vmem %s1, 248
  %s125 = scalar_lea.vmem %s0, 248
  %v126 = vld [vmem:[%s125] sm:$0xff]
  %127 = vst [vmem:[%s124] sm:$0xff] %v126
  %s128 = scalar_lea.vmem %s1, 256
  %s129 = scalar_lea.vmem %s0, 256
  %v130 = vld [vmem:[%s129] sm:$0xff]
  %131 = vst [vmem:[%s128] sm:$0xff] %v130
  %s132 = scalar_lea.vmem %s1, 264
  %s133 = scalar_lea.vmem %s0, 264
  %v134 = vld [vmem:[%s133] sm:$0xff]
  %135 = vst [vmem:[%s132] sm:$0xff] %v134
  %s136 = scalar_lea.vmem %s1, 272
  %s137 = scalar_lea.vmem %s0, 272
  %v138 = vld [vmem:[%s137] sm:$0xff]
  %139 = vst [vmem:[%s136] sm:$0xff] %v138
  %s140 = scalar_lea.vmem %s1, 280
  %s141 = scalar_lea.vmem %s0, 280
  %v142 = vld [vmem:[%s141] sm:$0xff]
  %143 = vst [vmem:[%s140] sm:$0xff] %v142
  %s144 = scalar_lea.vmem %s1, 288
  %s145 = scalar_lea.vmem %s0, 288
  %v146 = vld [vmem:[%s145] sm:$0xff]
  %147 = vst [vmem:[%s144] sm:$0xff] %v146
  %s148 = scalar_lea.vmem %s1, 296
  %s149 = scalar_lea.vmem %s0, 296
  %v150 = vld [vmem:[%s149] sm:$0xff]
  %151 = vst [vmem:[%s148] sm:$0xff] %v150
  %s152 = scalar_lea.vmem %s1, 304
  %s153 = scalar_lea.vmem %s0, 304
  %v154 = vld [vmem:[%s153] sm:$0xff]
  %155 = vst [vmem:[%s152] sm:$0xff] %v154
  %s156 = scalar_lea.vmem %s1, 312
  %s157 = scalar_lea.vmem %s0, 312
  %v158 = vld [vmem:[%s157] sm:$0xff]
  %159 = vst [vmem:[%s156] sm:$0xff] %v158
  %s160 = scalar_lea.vmem %s1, 320
  %s161 = scalar_lea.vmem %s0, 320
  %v162 = vld [vmem:[%s161] sm:$0xff]
  %163 = vst [vmem:[%s160] sm:$0xff] %v162
  %s164 = scalar_lea.vmem %s1, 328
  %s165 = scalar_lea.vmem %s0, 328
  %v166 = vld [vmem:[%s165] sm:$0xff]
  %167 = vst [vmem:[%s164] sm:$0xff] %v166
  %s168 = scalar_lea.vmem %s1, 336
  %s169 = scalar_lea.vmem %s0, 336
  %v170 = vld [vmem:[%s169] sm:$0xff]
  %171 = vst [vmem:[%s168] sm:$0xff] %v170
  %s172 = scalar_lea.vmem %s1, 344
  %s173 = scalar_lea.vmem %s0, 344
  %v174 = vld [vmem:[%s173] sm:$0xff]
  %175 = vst [vmem:[%s172] sm:$0xff] %v174
  %s176 = scalar_lea.vmem %s1, 352
  %s177 = scalar_lea.vmem %s0, 352
  %v178 = vld [vmem:[%s177] sm:$0xff]
  %179 = vst [vmem:[%s176] sm:$0xff] %v178
  %s180 = scalar_lea.vmem %s1, 360
  %s181 = scalar_lea.vmem %s0, 360
  %v182 = vld [vmem:[%s181] sm:$0xff]
  %183 = vst [vmem:[%s180] sm:$0xff] %v182
  %s184 = scalar_lea.vmem %s1, 368
  %s185 = scalar_lea.vmem %s0, 368
  %v186 = vld [vmem:[%s185] sm:$0xff]
  %187 = vst [vmem:[%s184] sm:$0xff] %v186
  %s188 = scalar_lea.vmem %s1, 376
  %s189 = scalar_lea.vmem %s0, 376
  %v190 = vld [vmem:[%s189] sm:$0xff]
  %191 = vst [vmem:[%s188] sm:$0xff] %v190

// kernel: complex_conv_ktUnder_CAIPI_3_forward.1
$region0: #{complex_conv_ktUnder_CAIPI_3_forward.1}
  #allocation0 [shape = 'u32[]', space=smem, size = 0x4, offset = 0x4, fixed_abs, tag = 'smem constant byte address 0x4 - core index']
  #allocation1 [shape = 'u32[72,128]{1,0:T(1,128)}', space=vmem, size = 0x9000, scoped, tag = 'internal scratch']
  %s0 = inlined_call_operand.vmem [shape: f32[16,108], index: 0, kind: input, shape index: {}]
  %s1 = inlined_call_operand.vmem [shape: f32[16,108], index: 1, kind: input, shape index: {}]
  %s2 = inlined_call_operand.vmem [shape: f32[16,1], index: 2, kind: input, shape index: {}]
  %s3 = inlined_call_operand.vmem [shape: f32[108,768], index: 3, kind: input, shape index: {}]
  %s4 = inlined_call_operand.vmem [shape: f32[108,768], index: 4, kind: input, shape index: {}]
  %s5 = inlined_call_operand.vmem [shape: f32[16,768], index: 5, kind: output, shape index: {}]
  %s6 = sld [smem:[#allocation0]]
  $region118: #{complex_conv_ktUnder_CAIPI_3_forward.1} parent=0
    _
  %s8 = ssub.s32 1, %s6
  %s9 = scalar_select 0, %s8, %s6
  $region1: #{complex_conv_ktUnder_CAIPI_3_forward.1} parent=0
    #allocation2 [shape = 'u8[344064]{0}', space=vmem, size = 0x54000, scoped, tag = 'input window, operand 3']
    #allocation3 [shape = 'u8[344064]{0}', space=vmem, size = 0x54000, scoped, tag = 'input window, operand 4']
    #allocation4 [shape = 'u8[49152]{0}', space=vmem, size = 0xc000, scoped, tag = 'output window, operand 0']
    loop: start=0, step=1, limit=4
    $region2: #{complex_conv_ktUnder_CAIPI_3_forward.1} parent=1 // loop_pre_header
      _
    $region3: #{complex_conv_ktUnder_CAIPI_3_forward.1} parent=1 // loop_header
      %s11 = sphi 0, %s15
      %p12 = scmp.ge.s32.totalorder %s11, 4
      %s19 = sphi 0, %s19
      %s21 = sphi 0, %s19
      %s22 = sphi 0, %s21
      %s36 = sphi 0, %s22
      %s40 = sphi 0, %s40
      %s42 = sphi 0, %s40
      %s43 = sphi 0, %s42
      %s57 = sphi 0, %s43
      %s61 = sphi 0, %s61
      %s63 = sphi 0, %s61
      %s64 = sphi 0, %s63
      %s78 = sphi 0, %s64
      %s84 = sphi 0, %s86
      %s87 = sphi 0, %s84
      %s88 = sphi 0, %s87
      %s104 = sphi 0, %s88
      %s110 = sphi 0, %s112
      %s113 = sphi 0, %s110
      %s114 = sphi 0, %s113
      %s130 = sphi 0, %s114
      %s136 = sphi 0, %s138
      %s139 = sphi 0, %s136
      %s140 = sphi 0, %s139
      %s156 = sphi 0, %s140
    $region4: #{complex_conv_ktUnder_CAIPI_3_forward.1} parent=1 // loop_header_branch
      %14 = sbr.rel (%p12) target = $region8
    $region5: #{complex_conv_ktUnder_CAIPI_3_forward.1} parent=1 // loop_body
      %s16 = ssub.s32 %s11, 1
      %s17 = ssub.s32 %s11, 2
      %s18 = sadd.s32 %s11, 1
      %s20 = sadd.s32 %s19, 1
      %p23 = scmp.eq.s32.totalorder %s11, 1
      %p24 = scmp.ne.s32.totalorder %s19, %s21
      %p25 = scmp.eq.s32.totalorder %s11, 0
      %p26 = por %p24, %p25
      %p27 = scmp.ne.s32.totalorder %s19, %s21
      %p28 = scmp.eq.s32.totalorder %s16, 1
      %p29 = por %p27, %p28
      %p30 = scmp.ne.s32.totalorder %s21, %s22
      %p31 = scmp.eq.s32.totalorder %s16, 0
      %p32 = por %p30, %p31
      %p33 = scmp.ne.s32.totalorder %s21, %s22
      %p34 = scmp.eq.s32.totalorder %s17, 1
      %p35 = por %p33, %p34
      %p37 = scmp.ne.s32.totalorder %s22, %s36
      %p38 = scmp.eq.s32.totalorder %s17, 0
      %p39 = por %p37, %p38
      %s41 = sadd.s32 %s40, 1
      %p44 = scmp.eq.s32.totalorder %s11, 1
      %p45 = scmp.ne.s32.totalorder %s40, %s42
      %p46 = scmp.eq.s32.totalorder %s11, 0
      %p47 = por %p45, %p46
      %p48 = scmp.ne.s32.totalorder %s40, %s42
      %p49 = scmp.eq.s32.totalorder %s16, 1
      %p50 = por %p48, %p49
      %p51 = scmp.ne.s32.totalorder %s42, %s43
      %p52 = scmp.eq.s32.totalorder %s16, 0
      %p53 = por %p51, %p52
      %p54 = scmp.ne.s32.totalorder %s42, %s43
      %p55 = scmp.eq.s32.totalorder %s17, 1
      %p56 = por %p54, %p55
      %p58 = scmp.ne.s32.totalorder %s43, %s57
      %p59 = scmp.eq.s32.totalorder %s17, 0
      %p60 = por %p58, %p59
      %s62 = sadd.s32 %s61, 1
      %p65 = scmp.eq.s32.totalorder %s11, 1
      %p66 = scmp.ne.s32.totalorder %s61, %s63
      %p67 = scmp.eq.s32.totalorder %s11, 0
      %p68 = por %p66, %p67
      %p69 = scmp.ne.s32.totalorder %s61, %s63
      %p70 = scmp.eq.s32.totalorder %s16, 1
      %p71 = por %p69, %p70
      %p72 = scmp.ne.s32.totalorder %s63, %s64
      %p73 = scmp.eq.s32.totalorder %s16, 0
      %p74 = por %p72, %p73
      %p75 = scmp.ne.s32.totalorder %s63, %s64
      %p76 = scmp.eq.s32.totalorder %s17, 1
      %p77 = por %p75, %p76
      %p79 = scmp.ne.s32.totalorder %s64, %s78
      %p80 = scmp.eq.s32.totalorder %s17, 0
      %p81 = por %p79, %p80
      %s82 = ssub.s32 %s11, %s18
      %p83 = scmp.eq.s32.totalorder %s82, 0
      %s85 = sadd.s32 %s84, 1
      %s86 = scalar_select %p83, %s84, %s85
      %p89 = pneg %p83
      %p90 = scmp.eq.s32.totalorder %s11, 1
      %p91 = por %p89, %p90
      %p92 = scmp.ne.s32.totalorder %s84, %s87
      %p93 = scmp.eq.s32.totalorder %s11, 0
      %p94 = por %p92, %p93
      %p95 = scmp.ne.s32.totalorder %s84, %s87
      %p96 = scmp.eq.s32.totalorder %s16, 1
      %p97 = por %p95, %p96
      %p98 = scmp.ne.s32.totalorder %s87, %s88
      %p99 = scmp.eq.s32.totalorder %s16, 0
      %p100 = por %p98, %p99
      %p101 = scmp.ne.s32.totalorder %s87, %s88
      %p102 = scmp.eq.s32.totalorder %s17, 1
      %p103 = por %p101, %p102
      %p105 = scmp.ne.s32.totalorder %s88, %s104
      %p106 = scmp.eq.s32.totalorder %s17, 0
      %p107 = por %p105, %p106
      %s108 = ssub.s32 %s11, %s18
      %p109 = scmp.eq.s32.totalorder %s108, 0
      %s111 = sadd.s32 %s110, 1
      %s112 = scalar_select %p109, %s110, %s111
      %p115 = pneg %p109
      %p116 = scmp.eq.s32.totalorder %s11, 1
      %p117 = por %p115, %p116
      %p118 = scmp.ne.s32.totalorder %s110, %s113
      %p119 = scmp.eq.s32.totalorder %s11, 0
      %p120 = por %p118, %p119
      %p121 = scmp.ne.s32.totalorder %s110, %s113
      %p122 = scmp.eq.s32.totalorder %s16, 1
      %p123 = por %p121, %p122
      %p124 = scmp.ne.s32.totalorder %s113, %s114
      %p125 = scmp.eq.s32.totalorder %s16, 0
      %p126 = por %p124, %p125
      %p127 = scmp.ne.s32.totalorder %s113, %s114
      %p128 = scmp.eq.s32.totalorder %s17, 1
      %p129 = por %p127, %p128
      %p131 = scmp.ne.s32.totalorder %s114, %s130
      %p132 = scmp.eq.s32.totalorder %s17, 0
      %p133 = por %p131, %p132
      %s134 = ssub.s32 %s11, %s18
      %p135 = scmp.eq.s32.totalorder %s134, 0
      %s137 = sadd.s32 %s136, 1
      %s138 = scalar_select %p135, %s136, %s137
      %p141 = pneg %p135
      %p142 = scmp.eq.s32.totalorder %s11, 1
      %p143 = por %p141, %p142
      %p144 = scmp.ne.s32.totalorder %s136, %s139
      %p145 = scmp.eq.s32.totalorder %s11, 0
      %p146 = por %p144, %p145
      %p147 = scmp.ne.s32.totalorder %s136, %s139
      %p148 = scmp.eq.s32.totalorder %s16, 1
      %p149 = por %p147, %p148
      %p150 = scmp.ne.s32.totalorder %s139, %s140
      %p151 = scmp.eq.s32.totalorder %s16, 0
      %p152 = por %p150, %p151
      %p153 = scmp.ne.s32.totalorder %s139, %s140
      %p154 = scmp.eq.s32.totalorder %s17, 1
      %p155 = por %p153, %p154
      %p157 = scmp.ne.s32.totalorder %s140, %s156
      %p158 = scmp.eq.s32.totalorder %s17, 0
      %p159 = por %p157, %p158
      %p160 = scmp.le.s32.totalorder 1, %s11
      %p161 = scmp.lt.s32.totalorder %s11, 3
      %p162 = pnand %p160, %p161
      %p163 = pneg %p162
      // Predicated region
      $region9: #{complex_conv_ktUnder_CAIPI_3_forward.1} parent=5 // pred_check
        _
      $region10: #{complex_conv_ktUnder_CAIPI_3_forward.1} parent=5 // pred_check_branch
        %165 = sbr.rel (%p162) target = $region12
      $region11: #{complex_conv_ktUnder_CAIPI_3_forward.1} parent=5 // pred_region
        %s166 = ssub.s32 %s11, 1
        // Predicated region
        $region13: #{complex_conv_ktUnder_CAIPI_3_forward.1} parent=11 // pred_check
          %p167 = pneg %p32
        $region14: #{complex_conv_ktUnder_CAIPI_3_forward.1} parent=11 // pred_check_branch
          %169 = sbr.rel (%p167) target = $region16
        $region15: #{complex_conv_ktUnder_CAIPI_3_forward.1} parent=11 // pred_region
          _
        $region16: #{complex_conv_ktUnder_CAIPI_3_forward.1} parent=11 // pred_fallthru
          _
        // Predicated region
        $region17: #{complex_conv_ktUnder_CAIPI_3_forward.1} parent=11 // pred_check
          %p170 = pneg %p53
        $region18: #{complex_conv_ktUnder_CAIPI_3_forward.1} parent=11 // pred_check_branch
          %172 = sbr.rel (%p170) target = $region20
        $region19: #{complex_conv_ktUnder_CAIPI_3_forward.1} parent=11 // pred_region
          _
        $region20: #{complex_conv_ktUnder_CAIPI_3_forward.1} parent=11 // pred_fallthru
          _
        // Predicated region
        $region21: #{complex_conv_ktUnder_CAIPI_3_forward.1} parent=11 // pred_check
          %p173 = pneg %p74
        $region22: #{complex_conv_ktUnder_CAIPI_3_forward.1} parent=11 // pred_check_branch
          %175 = sbr.rel (%p173) target = $region24
        $region23: #{complex_conv_ktUnder_CAIPI_3_forward.1} parent=11 // pred_region
          _
        $region24: #{complex_conv_ktUnder_CAIPI_3_forward.1} parent=11 // pred_fallthru
          _
      $region12: #{complex_conv_ktUnder_CAIPI_3_forward.1} parent=5 // pred_fallthru
        _
      %p176 = scmp.lt.s32.totalorder %s11, 2
      // Predicated region
      $region25: #{complex_conv_ktUnder_CAIPI_3_forward.1} parent=5 // pred_check
        %p177 = pneg %p176
      $region26: #{complex_conv_ktUnder_CAIPI_3_forward.1} parent=5 // pred_check_branch
        %179 = sbr.rel (%p177) target = $region28
      $region27: #{complex_conv_ktUnder_CAIPI_3_forward.1} parent=5 // pred_region
        // Predicated region
        $region29: #{complex_conv_ktUnder_CAIPI_3_forward.1} parent=27 // pred_check
          %p180 = pneg %p94
        $region30: #{complex_conv_ktUnder_CAIPI_3_forward.1} parent=27 // pred_check_branch
          %182 = sbr.rel (%p180) target = $region32
        $region31: #{complex_conv_ktUnder_CAIPI_3_forward.1} parent=27 // pred_region
          %s183 = sand.u32 %s84, 1
          %s184 = sand.u32 %s84, 1
          %s185 = smul.addr %s184, 336
          %s186 = scalar_lea.vmem [#allocation2], %s185
          %s187 = smul.u32 3, %s11
          %s188 = smul.addr %s187, 8
          %s189 = scalar_lea.vmem %s3, %s188
          // Predicated region
          $region33: #{complex_conv_ktUnder_CAIPI_3_forward.1} parent=31 // pred_check
            _
          $region34: #{complex_conv_ktUnder_CAIPI_3_forward.1} parent=31 // pred_check_branch
            %191 = sbr.rel (0) target = $region36
          $region35: #{complex_conv_ktUnder_CAIPI_3_forward.1} parent=31 // pred_region
            // Predicated region
            $region37: #{complex_conv_ktUnder_CAIPI_3_forward.1} parent=35 // pred_check
              _
            $region38: #{complex_conv_ktUnder_CAIPI_3_forward.1} parent=35 // pred_check_branch
              %193 = sbr.rel (0) target = $region40
            $region39: #{complex_conv_ktUnder_CAIPI_3_forward.1} parent=35 // pred_region
              loop: start=0, step=1, limit=1
              $region41: #{complex_conv_ktUnder_CAIPI_3_forward.1} parent=39 // loop_pre_header
                _
              $region42: #{complex_conv_ktUnder_CAIPI_3_forward.1} parent=39 // loop_header
                %s195 = sphi 0, %s199
                %p196 = scmp.ge.s32.totalorder %s195, 1
                %s200 = sphi %s189, %s189
                %s201 = sphi %s186, %s186
              $region43: #{complex_conv_ktUnder_CAIPI_3_forward.1} parent=39 // loop_header_branch
                %198 = sbr.rel (%p196) target = $region47
              $region44: #{complex_conv_ktUnder_CAIPI_3_forward.1} parent=39 // loop_body
                %v202 = vld [vmem:[%s200] sm:$0xff]
                %203 = vst [vmem:[%s201] sm:$0xff] %v202
                %v204 = vld [vmem:[%s200 + $0x8] sm:$0xff]
                %205 = vst [vmem:[%s201 + $0x8] sm:$0xff] %v204
                %v206 = vld [vmem:[%s200 + $0x10] sm:$0xff]
                %207 = vst [vmem:[%s201 + $0x10] sm:$0xff] %v206
                %v208 = vld [vmem:[%s200 + $0x30] sm:$0xff]
                %209 = vst [vmem:[%s201 + $0x18] sm:$0xff] %v208
                %v210 = vld [vmem:[%s200 + $0x38] sm:$0xff]
                %211 = vst [vmem:[%s201 + $0x20] sm:$0xff] %v210
                %v212 = vld [vmem:[%s200 + $0x40] sm:$0xff]
                %213 = vst [vmem:[%s201 + $0x28] sm:$0xff] %v212
                %v214 = vld [vmem:[%s200 + $0x60] sm:$0xff]
                %215 = vst [vmem:[%s201 + $0x30] sm:$0xff] %v214
                %v216 = vld [vmem:[%s200 + $0x68] sm:$0xff]
                %217 = vst [vmem:[%s201 + $0x38] sm:$0xff] %v216
                %v218 = vld [vmem:[%s200 + $0x70] sm:$0xff]
                %219 = vst [vmem:[%s201 + $0x40] sm:$0xff] %v218
                %v220 = vld [vmem:[%s200 + $0x90] sm:$0xff]
                %221 = vst [vmem:[%s201 + $0x48] sm:$0xff] %v220
                %v222 = vld [vmem:[%s200 + $0x98] sm:$0xff]
                %223 = vst [vmem:[%s201 + $0x50] sm:$0xff] %v222
                %v224 = vld [vmem:[%s200 + $0xa0] sm:$0xff]
                %225 = vst [vmem:[%s201 + $0x58] sm:$0xff] %v224
                %v226 = vld [vmem:[%s200 + $0xc0] sm:$0xff]
                %227 = vst [vmem:[%s201 + $0x60] sm:$0xff] %v226
                %v228 = vld [vmem:[%s200 + $0xc8] sm:$0xff]
                %229 = vst [vmem:[%s201 + $0x68] sm:$0xff] %v228
                %v230 = vld [vmem:[%s200 + $0xd0] sm:$0xff]
                %231 = vst [vmem:[%s201 + $0x70] sm:$0xff] %v230
                %v232 = vld [vmem:[%s200 + $0xf0] sm:$0xff]
                %233 = vst [vmem:[%s201 + $0x78] sm:$0xff] %v232
                %v234 = vld [vmem:[%s200 + $0xf8] sm:$0xff]
                %235 = vst [vmem:[%s201 + $0x80] sm:$0xff] %v234
                %v236 = vld [vmem:[%s200 + $0x100] sm:$0xff]
                %237 = vst [vmem:[%s201 + $0x88] sm:$0xff] %v236
                %v238 = vld [vmem:[%s200 + $0x120] sm:$0xff]
                %239 = vst [vmem:[%s201 + $0x90] sm:$0xff] %v238
                %v240 = vld [vmem:[%s200 + $0x128] sm:$0xff]
                %241 = vst [vmem:[%s201 + $0x98] sm:$0xff] %v240
                %v242 = vld [vmem:[%s200 + $0x130] sm:$0xff]
                %243 = vst [vmem:[%s201 + $0xa0] sm:$0xff] %v242
                %v244 = vld [vmem:[%s200 + $0x150] sm:$0xff]
                %245 = vst [vmem:[%s201 + $0xa8] sm:$0xff] %v244
                %v246 = vld [vmem:[%s200 + $0x158] sm:$0xff]
                %247 = vst [vmem:[%s201 + $0xb0] sm:$0xff] %v246
                %v248 = vld [vmem:[%s200 + $0x160] sm:$0xff]
                %249 = vst [vmem:[%s201 + $0xb8] sm:$0xff] %v248
                %v250 = vld [vmem:[%s200 + $0x180] sm:$0xff]
                %251 = vst [vmem:[%s201 + $0xc0] sm:$0xff] %v250
                %v252 = vld [vmem:[%s200 + $0x188] sm:$0xff]
                %253 = vst [vmem:[%s201 + $0xc8] sm:$0xff] %v252
                %v254 = vld [vmem:[%s200 + $0x190] sm:$0xff]
                %255 = vst [vmem:[%s201 + $0xd0] sm:$0xff] %v254
                %v256 = vld [vmem:[%s200 + $0x1b0] sm:$0xff]
                %257 = vst [vmem:[%s201 + $0xd8] sm:$0xff] %v256
                %v258 = vld [vmem:[%s200 + $0x1b8] sm:$0xff]
                %259 = vst [vmem:[%s201 + $0xe0] sm:$0xff] %v258
                %v260 = vld [vmem:[%s200 + $0x1c0] sm:$0xff]
                %261 = vst [vmem:[%s201 + $0xe8] sm:$0xff] %v260
                %v262 = vld [vmem:[%s200 + $0x1e0] sm:$0xff]
                %263 = vst [vmem:[%s201 + $0xf0] sm:$0xff] %v262
                %v264 = vld [vmem:[%s200 + $0x1e8] sm:$0xff]
                %265 = vst [vmem:[%s201 + $0xf8] sm:$0xff] %v264
                %v266 = vld [vmem:[%s200 + $0x1f0] sm:$0xff]
                %267 = vst [vmem:[%s201 + $0x100] sm:$0xff] %v266
                %v268 = vld [vmem:[%s200 + $0x210] sm:$0xff]
                %269 = vst [vmem:[%s201 + $0x108] sm:$0xff] %v268
                %v270 = vld [vmem:[%s200 + $0x218] sm:$0xff]
                %271 = vst [vmem:[%s201 + $0x110] sm:$0xff] %v270
                %v272 = vld [vmem:[%s200 + $0x220] sm:$0xff]
                %273 = vst [vmem:[%s201 + $0x118] sm:$0xff] %v272
                %v274 = vld [vmem:[%s200 + $0x240] sm:$0xff]
                %275 = vst [vmem:[%s201 + $0x120] sm:$0xff] %v274
                %v276 = vld [vmem:[%s200 + $0x248] sm:$0xff]
                %277 = vst [vmem:[%s201 + $0x128] sm:$0xff] %v276
                %v278 = vld [vmem:[%s200 + $0x250] sm:$0xff]
                %279 = vst [vmem:[%s201 + $0x130] sm:$0xff] %v278
                %v280 = vld [vmem:[%s200 + $0x270] sm:$0xff]
                %281 = vst [vmem:[%s201 + $0x138] sm:$0xff] %v280
                %v282 = vld [vmem:[%s200 + $0x278] sm:$0xff]
                %283 = vst [vmem:[%s201 + $0x140] sm:$0xff] %v282
                %v284 = vld [vmem:[%s200 + $0x280] sm:$0xff]
                %285 = vst [vmem:[%s201 + $0x148] sm:$0xff] %v284
              $region45: #{complex_conv_ktUnder_CAIPI_3_forward.1} parent=39 // loop_footer
                %s199 = sadd.s32 1, %s195
              $region46: #{complex_conv_ktUnder_CAIPI_3_forward.1} parent=39 // loop_footer_branch
                %194 = sbr.rel target = $region42
              $region47: #{complex_conv_ktUnder_CAIPI_3_forward.1} parent=39 // loop_exit
                _
            $region40: #{complex_conv_ktUnder_CAIPI_3_forward.1} parent=35 // pred_fallthru
              _
            // Predicated region
            $region48: #{complex_conv_ktUnder_CAIPI_3_forward.1} parent=35 // pred_check
              _
            $region49: #{complex_conv_ktUnder_CAIPI_3_forward.1} parent=35 // pred_check_branch
              %287 = sbr.rel target = $region51
            $region50: #{complex_conv_ktUnder_CAIPI_3_forward.1} parent=35 // pred_region
              _
            $region51: #{complex_conv_ktUnder_CAIPI_3_forward.1} parent=35 // pred_fallthru
              _
          $region36: #{complex_conv_ktUnder_CAIPI_3_forward.1} parent=31 // pred_fallthru
            _
          %288 = vnop
        $region32: #{complex_conv_ktUnder_CAIPI_3_forward.1} parent=27 // pred_fallthru
          _
        // Predicated region
        $region52: #{complex_conv_ktUnder_CAIPI_3_forward.1} parent=27 // pred_check
          %p289 = pneg %p120
        $region53: #{complex_conv_ktUnder_CAIPI_3_forward.1} parent=27 // pred_check_branch
          %291 = sbr.rel (%p289) target = $region55
        $region54: #{complex_conv_ktUnder_CAIPI_3_forward.1} parent=27 // pred_region
          %s292 = sand.u32 %s110, 1
          %s293 = sand.u32 %s110, 1
          %s294 = smul.addr %s293, 336
          %s295 = scalar_lea.vmem [#allocation3], %s294
          %s296 = smul.u32 3, %s11
          %s297 = smul.addr %s296, 8
          %s298 = scalar_lea.vmem %s4, %s297
          // Predicated region
          $region56: #{complex_conv_ktUnder_CAIPI_3_forward.1} parent=54 // pred_check
            _
          $region57: #{complex_conv_ktUnder_CAIPI_3_forward.1} parent=54 // pred_check_branch
            %300 = sbr.rel (0) target = $region59
          $region58: #{complex_conv_ktUnder_CAIPI_3_forward.1} parent=54 // pred_region
            // Predicated region
            $region60: #{complex_conv_ktUnder_CAIPI_3_forward.1} parent=58 // pred_check
              _
            $region61: #{complex_conv_ktUnder_CAIPI_3_forward.1} parent=58 // pred_check_branch
              %302 = sbr.rel (0) target = $region63
            $region62: #{complex_conv_ktUnder_CAIPI_3_forward.1} parent=58 // pred_region
              loop: start=0, step=1, limit=1
              $region64: #{complex_conv_ktUnder_CAIPI_3_forward.1} parent=62 // loop_pre_header
                _
              $region65: #{complex_conv_ktUnder_CAIPI_3_forward.1} parent=62 // loop_header
                %s304 = sphi 0, %s308
                %p305 = scmp.ge.s32.totalorder %s304, 1
                %s309 = sphi %s298, %s298
                %s310 = sphi %s295, %s295
              $region66: #{complex_conv_ktUnder_CAIPI_3_forward.1} parent=62 // loop_header_branch
                %307 = sbr.rel (%p305) target = $region70
              $region67: #{complex_conv_ktUnder_CAIPI_3_forward.1} parent=62 // loop_body
                %v311 = vld [vmem:[%s309] sm:$0xff]
                %312 = vst [vmem:[%s310] sm:$0xff] %v311
                %v313 = vld [vmem:[%s309 + $0x8] sm:$0xff]
                %314 = vst [vmem:[%s310 + $0x8] sm:$0xff] %v313
                %v315 = vld [vmem:[%s309 + $0x10] sm:$0xff]
                %316 = vst [vmem:[%s310 + $0x10] sm:$0xff] %v315
                %v317 = vld [vmem:[%s309 + $0x30] sm:$0xff]
                %318 = vst [vmem:[%s310 + $0x18] sm:$0xff] %v317
                %v319 = vld [vmem:[%s309 + $0x38] sm:$0xff]
                %320 = vst [vmem:[%s310 + $0x20] sm:$0xff] %v319
                %v321 = vld [vmem:[%s309 + $0x40] sm:$0xff]
                %322 = vst [vmem:[%s310 + $0x28] sm:$0xff] %v321
                %v323 = vld [vmem:[%s309 + $0x60] sm:$0xff]
                %324 = vst [vmem:[%s310 + $0x30] sm:$0xff] %v323
                %v325 = vld [vmem:[%s309 + $0x68] sm:$0xff]
                %326 = vst [vmem:[%s310 + $0x38] sm:$0xff] %v325
                %v327 = vld [vmem:[%s309 + $0x70] sm:$0xff]
                %328 = vst [vmem:[%s310 + $0x40] sm:$0xff] %v327
                %v329 = vld [vmem:[%s309 + $0x90] sm:$0xff]
                %330 = vst [vmem:[%s310 + $0x48] sm:$0xff] %v329
                %v331 = vld [vmem:[%s309 + $0x98] sm:$0xff]
                %332 = vst [vmem:[%s310 + $0x50] sm:$0xff] %v331
                %v333 = vld [vmem:[%s309 + $0xa0] sm:$0xff]
                %334 = vst [vmem:[%s310 + $0x58] sm:$0xff] %v333
                %v335 = vld [vmem:[%s309 + $0xc0] sm:$0xff]
                %336 = vst [vmem:[%s310 + $0x60] sm:$0xff] %v335
                %v337 = vld [vmem:[%s309 + $0xc8] sm:$0xff]
                %338 = vst [vmem:[%s310 + $0x68] sm:$0xff] %v337
                %v339 = vld [vmem:[%s309 + $0xd0] sm:$0xff]
                %340 = vst [vmem:[%s310 + $0x70] sm:$0xff] %v339
                %v341 = vld [vmem:[%s309 + $0xf0] sm:$0xff]
                %342 = vst [vmem:[%s310 + $0x78] sm:$0xff] %v341
                %v343 = vld [vmem:[%s309 + $0xf8] sm:$0xff]
                %344 = vst [vmem:[%s310 + $0x80] sm:$0xff] %v343
                %v345 = vld [vmem:[%s309 + $0x100] sm:$0xff]
                %346 = vst [vmem:[%s310 + $0x88] sm:$0xff] %v345
                %v347 = vld [vmem:[%s309 + $0x120] sm:$0xff]
                %348 = vst [vmem:[%s310 + $0x90] sm:$0xff] %v347
                %v349 = vld [vmem:[%s309 + $0x128] sm:$0xff]
                %350 = vst [vmem:[%s310 + $0x98] sm:$0xff] %v349
                %v351 = vld [vmem:[%s309 + $0x130] sm:$0xff]
                %352 = vst [vmem:[%s310 + $0xa0] sm:$0xff] %v351
                %v353 = vld [vmem:[%s309 + $0x150] sm:$0xff]
                %354 = vst [vmem:[%s310 + $0xa8] sm:$0xff] %v353
                %v355 = vld [vmem:[%s309 + $0x158] sm:$0xff]
                %356 = vst [vmem:[%s310 + $0xb0] sm:$0xff] %v355
                %v357 = vld [vmem:[%s309 + $0x160] sm:$0xff]
                %358 = vst [vmem:[%s310 + $0xb8] sm:$0xff] %v357
                %v359 = vld [vmem:[%s309 + $0x180] sm:$0xff]
                %360 = vst [vmem:[%s310 + $0xc0] sm:$0xff] %v359
                %v361 = vld [vmem:[%s309 + $0x188] sm:$0xff]
                %362 = vst [vmem:[%s310 + $0xc8] sm:$0xff] %v361
                %v363 = vld [vmem:[%s309 + $0x190] sm:$0xff]
                %364 = vst [vmem:[%s310 + $0xd0] sm:$0xff] %v363
                %v365 = vld [vmem:[%s309 + $0x1b0] sm:$0xff]
                %366 = vst [vmem:[%s310 + $0xd8] sm:$0xff] %v365
                %v367 = vld [vmem:[%s309 + $0x1b8] sm:$0xff]
                %368 = vst [vmem:[%s310 + $0xe0] sm:$0xff] %v367
                %v369 = vld [vmem:[%s309 + $0x1c0] sm:$0xff]
                %370 = vst [vmem:[%s310 + $0xe8] sm:$0xff] %v369
                %v371 = vld [vmem:[%s309 + $0x1e0] sm:$0xff]
                %372 = vst [vmem:[%s310 + $0xf0] sm:$0xff] %v371
                %v373 = vld [vmem:[%s309 + $0x1e8] sm:$0xff]
                %374 = vst [vmem:[%s310 + $0xf8] sm:$0xff] %v373
                %v375 = vld [vmem:[%s309 + $0x1f0] sm:$0xff]
                %376 = vst [vmem:[%s310 + $0x100] sm:$0xff] %v375
                %v377 = vld [vmem:[%s309 + $0x210] sm:$0xff]
                %378 = vst [vmem:[%s310 + $0x108] sm:$0xff] %v377
                %v379 = vld [vmem:[%s309 + $0x218] sm:$0xff]
                %380 = vst [vmem:[%s310 + $0x110] sm:$0xff] %v379
                %v381 = vld [vmem:[%s309 + $0x220] sm:$0xff]
                %382 = vst [vmem:[%s310 + $0x118] sm:$0xff] %v381
                %v383 = vld [vmem:[%s309 + $0x240] sm:$0xff]
                %384 = vst [vmem:[%s310 + $0x120] sm:$0xff] %v383
                %v385 = vld [vmem:[%s309 + $0x248] sm:$0xff]
                %386 = vst [vmem:[%s310 + $0x128] sm:$0xff] %v385
                %v387 = vld [vmem:[%s309 + $0x250] sm:$0xff]
                %388 = vst [vmem:[%s310 + $0x130] sm:$0xff] %v387
                %v389 = vld [vmem:[%s309 + $0x270] sm:$0xff]
                %390 = vst [vmem:[%s310 + $0x138] sm:$0xff] %v389
                %v391 = vld [vmem:[%s309 + $0x278] sm:$0xff]
                %392 = vst [vmem:[%s310 + $0x140] sm:$0xff] %v391
                %v393 = vld [vmem:[%s309 + $0x280] sm:$0xff]
                %394 = vst [vmem:[%s310 + $0x148] sm:$0xff] %v393
              $region68: #{complex_conv_ktUnder_CAIPI_3_forward.1} parent=62 // loop_footer
                %s308 = sadd.s32 1, %s304
              $region69: #{complex_conv_ktUnder_CAIPI_3_forward.1} parent=62 // loop_footer_branch
                %303 = sbr.rel target = $region65
              $region70: #{complex_conv_ktUnder_CAIPI_3_forward.1} parent=62 // loop_exit
                _
            $region63: #{complex_conv_ktUnder_CAIPI_3_forward.1} parent=58 // pred_fallthru
              _
            // Predicated region
            $region71: #{complex_conv_ktUnder_CAIPI_3_forward.1} parent=58 // pred_check
              _
            $region72: #{complex_conv_ktUnder_CAIPI_3_forward.1} parent=58 // pred_check_branch
              %396 = sbr.rel target = $region74
            $region73: #{complex_conv_ktUnder_CAIPI_3_forward.1} parent=58 // pred_region
              _
            $region74: #{complex_conv_ktUnder_CAIPI_3_forward.1} parent=58 // pred_fallthru
              _
          $region59: #{complex_conv_ktUnder_CAIPI_3_forward.1} parent=54 // pred_fallthru
            _
          %397 = vnop
        $region55: #{complex_conv_ktUnder_CAIPI_3_forward.1} parent=27 // pred_fallthru
          _
      $region28: #{complex_conv_ktUnder_CAIPI_3_forward.1} parent=5 // pred_fallthru
        _
      %p398 = scmp.le.s32.totalorder 1, %s11
      %p399 = scmp.lt.s32.totalorder %s11, 3
      %p400 = pnand %p398, %p399
      %p401 = pneg %p400
      // Predicated region
      $region75: #{complex_conv_ktUnder_CAIPI_3_forward.1} parent=5 // pred_check
        _
      $region76: #{complex_conv_ktUnder_CAIPI_3_forward.1} parent=5 // pred_check_branch
        %403 = sbr.rel (%p400) target = $region78
      $region77: #{complex_conv_ktUnder_CAIPI_3_forward.1} parent=5 // pred_region
        %s404 = ssub.s32 %s11, 1
        %s405 = sand.u32 %s87, 1
        %s406 = sand.u32 %s87, 1
        %s407 = smul.addr %s406, 336
        %s408 = scalar_lea.vmem [#allocation2], %s407
        // Predicated region
        $region79: #{complex_conv_ktUnder_CAIPI_3_forward.1} parent=77 // pred_check
          %p409 = pneg %p100
        $region80: #{complex_conv_ktUnder_CAIPI_3_forward.1} parent=77 // pred_check_branch
          %411 = sbr.rel (%p409) target = $region82
        $region81: #{complex_conv_ktUnder_CAIPI_3_forward.1} parent=77 // pred_region
          _
        $region82: #{complex_conv_ktUnder_CAIPI_3_forward.1} parent=77 // pred_fallthru
          _
        %s412 = sand.u32 %s113, 1
        %s413 = sand.u32 %s113, 1
        %s414 = smul.addr %s413, 336
        %s415 = scalar_lea.vmem [#allocation3], %s414
        // Predicated region
        $region83: #{complex_conv_ktUnder_CAIPI_3_forward.1} parent=77 // pred_check
          %p416 = pneg %p126
        $region84: #{complex_conv_ktUnder_CAIPI_3_forward.1} parent=77 // pred_check_branch
          %418 = sbr.rel (%p416) target = $region86
        $region85: #{complex_conv_ktUnder_CAIPI_3_forward.1} parent=77 // pred_region
          _
        $region86: #{complex_conv_ktUnder_CAIPI_3_forward.1} parent=77 // pred_fallthru
          _
        %p419 = pneg %p32
        %p420 = pneg %p29
        %p421 = pneg %p53
        %p422 = pneg %p50
        %p423 = pneg %p74
        %p424 = pneg %p71
        %s425 = sand.u32 %s87, 1
        %s426 = sand.u32 %s87, 1
        %s427 = smul.addr %s426, 336
        %s428 = scalar_lea.vmem [#allocation2], %s427
        %p429 = pneg %p100
        %p430 = pneg %p97
        %s431 = sand.u32 %s113, 1
        %s432 = sand.u32 %s113, 1
        %s433 = smul.addr %s432, 336
        %s434 = scalar_lea.vmem [#allocation3], %s433
        %p435 = pneg %p126
        %p436 = pneg %p123
        %p437 = pneg %p152
        %p438 = pneg %p149
        %s439 = sand.u32 %s139, 1
        %s440 = sand.u32 %s139, 1
        %s441 = smul.addr %s440, 48
        %s442 = scalar_lea.vmem [#allocation4], %s441
        %s443 = smul.u32 3, %s16
        %s444 = smul.u32 3, %s16
        %s445 = smul.u32 3, %s16
        %v446 = vld [vmem:[%s0] sm:$0xff]
        %v447 = vld [vmem:[%s0 + $0x8] sm:$0xff]
        %v448 = vld [vmem:[%s408] sm:$0xff]
        %v449 = vld [vmem:[%s408 + $0x8] sm:$0xff]
        %v450 = vld [vmem:[%s408 + $0x10] sm:$0xff]
        %v451 = vld [vmem:[%s408 + $0x18] sm:$0xff]
        %v452 = vld [vmem:[%s408 + $0x20] sm:$0xff]
        %v453 = vld [vmem:[%s408 + $0x28] sm:$0xff]
        %v454 = vld [vmem:[%s408 + $0x30] sm:$0xff]
        %v455 = vld [vmem:[%s408 + $0x38] sm:$0xff]
        %v456 = vld [vmem:[%s408 + $0x40] sm:$0xff]
        %v457 = vld [vmem:[%s408 + $0x48] sm:$0xff]
        %v458 = vld [vmem:[%s408 + $0x50] sm:$0xff]
        %v459 = vld [vmem:[%s408 + $0x58] sm:$0xff]
        %v460 = vld [vmem:[%s408 + $0x60] sm:$0xff]
        %v461 = vld [vmem:[%s408 + $0x68] sm:$0xff]
        %v462 = vld [vmem:[%s408 + $0x70] sm:$0xff]
        %v463 = vld [vmem:[%s408 + $0x78] sm:$0xff]
        %v464 = vld [vmem:[%s408 + $0x80] sm:$0xff]
        %v465 = vld [vmem:[%s408 + $0x88] sm:$0xff]
        %v466 = vld [vmem:[%s408 + $0x90] sm:$0xff]
        %v467 = vld [vmem:[%s408 + $0x98] sm:$0xff]
        %v468 = vld [vmem:[%s408 + $0xa0] sm:$0xff]
        %v469 = vld [vmem:[%s408 + $0xa8] sm:$0xff]
        %v470 = vld [vmem:[%s408 + $0xb0] sm:$0xff]
        %v471 = vld [vmem:[%s408 + $0xb8] sm:$0xff]
        %v472 = vld [vmem:[%s408 + $0xc0] sm:$0xff]
        %v473 = vld [vmem:[%s408 + $0xc8] sm:$0xff]
        %v474 = vld [vmem:[%s408 + $0xd0] sm:$0xff]
        %v475 = vld [vmem:[%s408 + $0xd8] sm:$0xff]
        %v476 = vld [vmem:[%s408 + $0xe0] sm:$0xff]
        %v477 = vld [vmem:[%s408 + $0xe8] sm:$0xff]
        %v478 = vld [vmem:[%s408 + $0xf0] sm:$0xff]
        %v479 = vld [vmem:[%s408 + $0xf8] sm:$0xff]
        %v480 = vld [vmem:[%s408 + $0x100] sm:$0xff]
        %v481 = vld [vmem:[%s408 + $0x108] sm:$0xff]
        %v482 = vld [vmem:[%s408 + $0x110] sm:$0xff]
        %v483 = vld [vmem:[%s408 + $0x118] sm:$0xff]
        %v484 = vld [vmem:[%s408 + $0x120] sm:$0xff]
        %v485 = vld [vmem:[%s408 + $0x128] sm:$0xff]
        %v486 = vld [vmem:[%s408 + $0x130] sm:$0xff]
        %v487 = vld [vmem:[%s408 + $0x138] sm:$0xf]
        %v488 = vld [vmem:[%s408 + $0x140] sm:$0xf]
        %v489 = vld [vmem:[%s408 + $0x148] sm:$0xf]
        %v490 = vld [vmem:[%s1] sm:$0xff]
        %v491 = vld [vmem:[%s1 + $0x8] sm:$0xff]
        %v492 = vld [vmem:[%s415] sm:$0xff]
        %v493 = vld [vmem:[%s415 + $0x8] sm:$0xff]
        %v494 = vld [vmem:[%s415 + $0x10] sm:$0xff]
        %v495 = vld [vmem:[%s415 + $0x18] sm:$0xff]
        %v496 = vld [vmem:[%s415 + $0x20] sm:$0xff]
        %v497 = vld [vmem:[%s415 + $0x28] sm:$0xff]
        %v498 = vld [vmem:[%s415 + $0x30] sm:$0xff]
        %v499 = vld [vmem:[%s415 + $0x38] sm:$0xff]
        %v500 = vld [vmem:[%s415 + $0x40] sm:$0xff]
        %v501 = vld [vmem:[%s415 + $0x48] sm:$0xff]
        %v502 = vld [vmem:[%s415 + $0x50] sm:$0xff]
        %v503 = vld [vmem:[%s415 + $0x58] sm:$0xff]
        %v504 = vld [vmem:[%s415 + $0x60] sm:$0xff]
        %v505 = vld [vmem:[%s415 + $0x68] sm:$0xff]
        %v506 = vld [vmem:[%s415 + $0x70] sm:$0xff]
        %v507 = vld [vmem:[%s415 + $0x78] sm:$0xff]
        %v508 = vld [vmem:[%s415 + $0x80] sm:$0xff]
        %v509 = vld [vmem:[%s415 + $0x88] sm:$0xff]
        %v510 = vld [vmem:[%s415 + $0x90] sm:$0xff]
        %v511 = vld [vmem:[%s415 + $0x98] sm:$0xff]
        %v512 = vld [vmem:[%s415 + $0xa0] sm:$0xff]
        %v513 = vld [vmem:[%s415 + $0xa8] sm:$0xff]
        %v514 = vld [vmem:[%s415 + $0xb0] sm:$0xff]
        %v515 = vld [vmem:[%s415 + $0xb8] sm:$0xff]
        %v516 = vld [vmem:[%s415 + $0xc0] sm:$0xff]
        %v517 = vld [vmem:[%s415 + $0xc8] sm:$0xff]
        %v518 = vld [vmem:[%s415 + $0xd0] sm:$0xff]
        %v519 = vld [vmem:[%s415 + $0xd8] sm:$0xff]
        %v520 = vld [vmem:[%s415 + $0xe0] sm:$0xff]
        %v521 = vld [vmem:[%s415 + $0xe8] sm:$0xff]
        %v522 = vld [vmem:[%s415 + $0xf0] sm:$0xff]
        %v523 = vld [vmem:[%s415 + $0xf8] sm:$0xff]
        %v524 = vld [vmem:[%s415 + $0x100] sm:$0xff]
        %v525 = vld [vmem:[%s415 + $0x108] sm:$0xff]
        %v526 = vld [vmem:[%s415 + $0x110] sm:$0xff]
        %v527 = vld [vmem:[%s415 + $0x118] sm:$0xff]
        %v528 = vld [vmem:[%s415 + $0x120] sm:$0xff]
        %v529 = vld [vmem:[%s415 + $0x128] sm:$0xff]
        %v530 = vld [vmem:[%s415 + $0x130] sm:$0xff]
        %v531 = vld [vmem:[%s415 + $0x138] sm:$0xf]
        %v532 = vld [vmem:[%s415 + $0x140] sm:$0xf]
        %v533 = vld [vmem:[%s415 + $0x148] sm:$0xf]
        %vm534 = vcmask 883712
        %v536 = vsel %vm534, %v490, 0
        %v539 = vsel %vm534, %v491, 0
        %vm541 = vcmask 1043456
        %v543 = vsel %vm541, %v531, 0
        %v546 = vsel %vm541, %v532, 0
        %v549 = vsel %vm541, %v533, 0
        %551 = vmatpush.msra.mxu0 0.0
        %552 = vmatpush.msra.mxu0 0.0
        %553 = vmatpush.msra.mxu0 %v543
        %554 = vmatpush.msra.mxu0 %v528
        %555 = vmatpush.msra.mxu0 %v525
        %556 = vmatpush.msra.mxu0 %v522
        %557 = vmatpush.msra.mxu0 %v519
        %558 = vmatpush.msra.mxu0 %v516
        %559 = vmatpush.msra.mxu0 %v513
        %560 = vmatpush.msra.mxu0 %v510
        %561 = vmatpush.msra.mxu0 %v507
        %562 = vmatpush.msra.mxu0 %v504
        %563 = vmatpush.msra.mxu0 %v501
        %564 = vmatpush.msra.mxu0 %v498
        %565 = vmatpush.msra.mxu0 %v495
        %566 = vmatpush.msra.mxu0 %v492
        %567 = vmatmul.f32.gmra.mxu0 %v536
        %v568 = vpop.f32.mrf.mxu0
        %v569 = vadd.f32 0.0, %v568
        %570 = vmatmul.f32.gmra.mxu0 %v539
        %v571 = vpop.f32.mrf.mxu0
        %v572 = vadd.f32 0.0, %v571
        %573 = vdwg.mxu0
        %574 = vmatpush.msra.mxu0 0.0
        %575 = vmatpush.msra.mxu0 0.0
        %576 = vmatpush.msra.mxu0 %v546
        %577 = vmatpush.msra.mxu0 %v529
        %578 = vmatpush.msra.mxu0 %v526
        %579 = vmatpush.msra.mxu0 %v523
        %580 = vmatpush.msra.mxu0 %v520
        %581 = vmatpush.msra.mxu0 %v517
        %582 = vmatpush.msra.mxu0 %v514
        %583 = vmatpush.msra.mxu0 %v511
        %584 = vmatpush.msra.mxu0 %v508
        %585 = vmatpush.msra.mxu0 %v505
        %586 = vmatpush.msra.mxu0 %v502
        %587 = vmatpush.msra.mxu0 %v499
        %588 = vmatpush.msra.mxu0 %v496
        %589 = vmatpush.msra.mxu0 %v493
        %590 = vmatmul.f32.gmra.mxu0 %v536
        %v591 = vpop.f32.mrf.mxu0
        %v592 = vadd.f32 0.0, %v591
        %593 = vmatmul.f32.gmra.mxu0 %v539
        %v594 = vpop.f32.mrf.mxu0
        %v595 = vadd.f32 0.0, %v594
        %596 = vdwg.mxu0
        %597 = vmatpush.msra.mxu0 0.0
        %598 = vmatpush.msra.mxu0 0.0
        %599 = vmatpush.msra.mxu0 %v549
        %600 = vmatpush.msra.mxu0 %v530
        %601 = vmatpush.msra.mxu0 %v527
        %602 = vmatpush.msra.mxu0 %v524
        %603 = vmatpush.msra.mxu0 %v521
        %604 = vmatpush.msra.mxu0 %v518
        %605 = vmatpush.msra.mxu0 %v515
        %606 = vmatpush.msra.mxu0 %v512
        %607 = vmatpush.msra.mxu0 %v509
        %608 = vmatpush.msra.mxu0 %v506
        %609 = vmatpush.msra.mxu0 %v503
        %610 = vmatpush.msra.mxu0 %v500
        %611 = vmatpush.msra.mxu0 %v497
        %612 = vmatpush.msra.mxu0 %v494
        %613 = vmatmul.f32.gmra.mxu0 %v536
        %v614 = vpop.f32.mrf.mxu0
        %v615 = vadd.f32 0.0, %v614
        %616 = vmatmul.f32.gmra.mxu0 %v539
        %v617 = vpop.f32.mrf.mxu0
        %v618 = vadd.f32 0.0, %v617
        %619 = vdwg.mxu0
        %v621 = vsel %vm534, %v446, 0
        %v624 = vsel %vm534, %v447, 0
        %v627 = vsel %vm541, %v487, 0
        %v630 = vsel %vm541, %v488, 0
        %v633 = vsel %vm541, %v489, 0
        %635 = vmatpush.msra.mxu0 0.0
        %636 = vmatpush.msra.mxu0 0.0
        %637 = vmatpush.msra.mxu0 %v627
        %638 = vmatpush.msra.mxu0 %v484
        %639 = vmatpush.msra.mxu0 %v481
        %640 = vmatpush.msra.mxu0 %v478
        %641 = vmatpush.msra.mxu0 %v475
        %642 = vmatpush.msra.mxu0 %v472
        %643 = vmatpush.msra.mxu0 %v469
        %644 = vmatpush.msra.mxu0 %v466
        %645 = vmatpush.msra.mxu0 %v463
        %646 = vmatpush.msra.mxu0 %v460
        %647 = vmatpush.msra.mxu0 %v457
        %648 = vmatpush.msra.mxu0 %v454
        %649 = vmatpush.msra.mxu0 %v451
        %650 = vmatpush.msra.mxu0 %v448
        %651 = vmatmul.f32.gmra.mxu0 %v621
        %v652 = vpop.f32.mrf.mxu0
        %v653 = vadd.f32 %v569, %v652
        %654 = vmatmul.f32.gmra.mxu0 %v624
        %v655 = vpop.f32.mrf.mxu0
        %v656 = vadd.f32 %v572, %v655
        %657 = vdwg.mxu0
        %658 = vmatpush.msra.mxu0 0.0
        %659 = vmatpush.msra.mxu0 0.0
        %660 = vmatpush.msra.mxu0 %v630
        %661 = vmatpush.msra.mxu0 %v485
        %662 = vmatpush.msra.mxu0 %v482
        %663 = vmatpush.msra.mxu0 %v479
        %664 = vmatpush.msra.mxu0 %v476
        %665 = vmatpush.msra.mxu0 %v473
        %666 = vmatpush.msra.mxu0 %v470
        %667 = vmatpush.msra.mxu0 %v467
        %668 = vmatpush.msra.mxu0 %v464
        %669 = vmatpush.msra.mxu0 %v461
        %670 = vmatpush.msra.mxu0 %v458
        %671 = vmatpush.msra.mxu0 %v455
        %672 = vmatpush.msra.mxu0 %v452
        %673 = vmatpush.msra.mxu0 %v449
        %674 = vmatmul.f32.gmra.mxu0 %v621
        %v675 = vpop.f32.mrf.mxu0
        %v676 = vadd.f32 %v592, %v675
        %677 = vmatmul.f32.gmra.mxu0 %v624
        %v678 = vpop.f32.mrf.mxu0
        %v679 = vadd.f32 %v595, %v678
        %680 = vdwg.mxu0
        %681 = vmatpush.msra.mxu0 0.0
        %682 = vmatpush.msra.mxu0 0.0
        %683 = vmatpush.msra.mxu0 %v633
        %684 = vmatpush.msra.mxu0 %v486
        %685 = vmatpush.msra.mxu0 %v483
        %686 = vmatpush.msra.mxu0 %v480
        %687 = vmatpush.msra.mxu0 %v477
        %688 = vmatpush.msra.mxu0 %v474
        %689 = vmatpush.msra.mxu0 %v471
        %690 = vmatpush.msra.mxu0 %v468
        %691 = vmatpush.msra.mxu0 %v465
        %692 = vmatpush.msra.mxu0 %v462
        %693 = vmatpush.msra.mxu0 %v459
        %694 = vmatpush.msra.mxu0 %v456
        %695 = vmatpush.msra.mxu0 %v453
        %696 = vmatpush.msra.mxu0 %v450
        %697 = vmatmul.f32.gmra.mxu0 %v621
        %v698 = vpop.f32.mrf.mxu0
        %v699 = vadd.f32 %v615, %v698
        %700 = vmatmul.f32.gmra.mxu0 %v624
        %v701 = vpop.f32.mrf.mxu0
        %v702 = vadd.f32 %v618, %v701
        %703 = vdwg.mxu0
        %v704 = vld [vmem:[%s2] sm:$0xff]
        %v705 = vld [vmem:[%s2 + $0x8] sm:$0xff]
        %707 = vset.pattern.permute.xlu0 0
        %708 = vperm.xlu0 %707, %v704
        %v709 = vpop.permute.xlu0 %708
        %712 = vset.pattern.permute.xlu0 0
        %713 = vperm.xlu0 %712, %v705
        %v714 = vpop.permute.xlu0 %713
        %v716 = vadd.f32 %v653, %v709
        %v717 = vadd.f32 %v676, %v709
        %v718 = vadd.f32 %v699, %v709
        %v719 = vadd.f32 %v656, %v714
        %v720 = vadd.f32 %v679, %v714
        %v721 = vadd.f32 %v702, %v714
        %722 = vst [vmem:[%s442] sm:$0xff] %v716
        %723 = vst [vmem:[%s442 + $0x8] sm:$0xff] %v717
        %724 = vst [vmem:[%s442 + $0x10] sm:$0xff] %v718
        %725 = vst [vmem:[%s442 + $0x18] sm:$0xff] %v719
        %726 = vst [vmem:[%s442 + $0x20] sm:$0xff] %v720
        %727 = vst [vmem:[%s442 + $0x28] sm:$0xff] %v721
        %s728 = sand.u32 %s139, 1
        %s729 = sand.u32 %s139, 1
        %s730 = smul.addr %s729, 48
        %s731 = scalar_lea.vmem [#allocation4], %s730
        // Predicated region
        $region87: #{complex_conv_ktUnder_CAIPI_3_forward.1} parent=77 // pred_check
          %p732 = pneg %p149
        $region88: #{complex_conv_ktUnder_CAIPI_3_forward.1} parent=77 // pred_check_branch
          %734 = sbr.rel (%p732) target = $region90
        $region89: #{complex_conv_ktUnder_CAIPI_3_forward.1} parent=77 // pred_region
          %s735 = smul.u32 3, %s16
          %s736 = smul.addr %s735, 8
          %s737 = scalar_lea.vmem %s5, %s736
          // Predicated region
          $region91: #{complex_conv_ktUnder_CAIPI_3_forward.1} parent=89 // pred_check
            _
          $region92: #{complex_conv_ktUnder_CAIPI_3_forward.1} parent=89 // pred_check_branch
            %739 = sbr.rel (0) target = $region94
          $region93: #{complex_conv_ktUnder_CAIPI_3_forward.1} parent=89 // pred_region
            // Predicated region
            $region95: #{complex_conv_ktUnder_CAIPI_3_forward.1} parent=93 // pred_check
              _
            $region96: #{complex_conv_ktUnder_CAIPI_3_forward.1} parent=93 // pred_check_branch
              %741 = sbr.rel (0) target = $region98
            $region97: #{complex_conv_ktUnder_CAIPI_3_forward.1} parent=93 // pred_region
              loop: start=0, step=1, limit=1
              $region99: #{complex_conv_ktUnder_CAIPI_3_forward.1} parent=97 // loop_pre_header
                _
              $region100: #{complex_conv_ktUnder_CAIPI_3_forward.1} parent=97 // loop_header
                %s743 = sphi 0, %s747
                %p744 = scmp.ge.s32.totalorder %s743, 1
                %s748 = sphi %s731, %s731
                %s749 = sphi %s737, %s737
              $region101: #{complex_conv_ktUnder_CAIPI_3_forward.1} parent=97 // loop_header_branch
                %746 = sbr.rel (%p744) target = $region105
              $region102: #{complex_conv_ktUnder_CAIPI_3_forward.1} parent=97 // loop_body
                %v750 = vld [vmem:[%s748] sm:$0xff]
                %751 = vst [vmem:[%s749] sm:$0xff] %v750
                %v752 = vld [vmem:[%s748 + $0x8] sm:$0xff]
                %753 = vst [vmem:[%s749 + $0x8] sm:$0xff] %v752
                %v754 = vld [vmem:[%s748 + $0x10] sm:$0xff]
                %755 = vst [vmem:[%s749 + $0x10] sm:$0xff] %v754
                %v756 = vld [vmem:[%s748 + $0x18] sm:$0xff]
                %757 = vst [vmem:[%s749 + $0x30] sm:$0xff] %v756
                %v758 = vld [vmem:[%s748 + $0x20] sm:$0xff]
                %759 = vst [vmem:[%s749 + $0x38] sm:$0xff] %v758
                %v760 = vld [vmem:[%s748 + $0x28] sm:$0xff]
                %761 = vst [vmem:[%s749 + $0x40] sm:$0xff] %v760
              $region103: #{complex_conv_ktUnder_CAIPI_3_forward.1} parent=97 // loop_footer
                %s747 = sadd.s32 1, %s743
              $region104: #{complex_conv_ktUnder_CAIPI_3_forward.1} parent=97 // loop_footer_branch
                %742 = sbr.rel target = $region100
              $region105: #{complex_conv_ktUnder_CAIPI_3_forward.1} parent=97 // loop_exit
                _
            $region98: #{complex_conv_ktUnder_CAIPI_3_forward.1} parent=93 // pred_fallthru
              _
            // Predicated region
            $region106: #{complex_conv_ktUnder_CAIPI_3_forward.1} parent=93 // pred_check
              _
            $region107: #{complex_conv_ktUnder_CAIPI_3_forward.1} parent=93 // pred_check_branch
              %763 = sbr.rel target = $region109
            $region108: #{complex_conv_ktUnder_CAIPI_3_forward.1} parent=93 // pred_region
              _
            $region109: #{complex_conv_ktUnder_CAIPI_3_forward.1} parent=93 // pred_fallthru
              _
          $region94: #{complex_conv_ktUnder_CAIPI_3_forward.1} parent=89 // pred_fallthru
            _
          %764 = vnop
        $region90: #{complex_conv_ktUnder_CAIPI_3_forward.1} parent=77 // pred_fallthru
          _
      $region78: #{complex_conv_ktUnder_CAIPI_3_forward.1} parent=5 // pred_fallthru
        _
      %p765 = scmp.le.s32.totalorder 2, %s11
      // Predicated region
      $region110: #{complex_conv_ktUnder_CAIPI_3_forward.1} parent=5 // pred_check
        %p766 = pneg %p765
      $region111: #{complex_conv_ktUnder_CAIPI_3_forward.1} parent=5 // pred_check_branch
        %768 = sbr.rel (%p766) target = $region113
      $region112: #{complex_conv_ktUnder_CAIPI_3_forward.1} parent=5 // pred_region
        %s769 = ssub.s32 %s11, 2
        // Predicated region
        $region114: #{complex_conv_ktUnder_CAIPI_3_forward.1} parent=112 // pred_check
          %p770 = pneg %p155
        $region115: #{complex_conv_ktUnder_CAIPI_3_forward.1} parent=112 // pred_check_branch
          %772 = sbr.rel (%p770) target = $region117
        $region116: #{complex_conv_ktUnder_CAIPI_3_forward.1} parent=112 // pred_region
          %s773 = sand.u32 %s140, 1
          %s774 = sand.u32 %s140, 1
          %s775 = smul.addr %s774, 48
          %s776 = scalar_lea.vmem [#allocation4], %s775
        $region117: #{complex_conv_ktUnder_CAIPI_3_forward.1} parent=112 // pred_fallthru
          _
      $region113: #{complex_conv_ktUnder_CAIPI_3_forward.1} parent=5 // pred_fallthru
        _
    $region6: #{complex_conv_ktUnder_CAIPI_3_forward.1} parent=1 // loop_footer
      %s15 = sadd.s32 1, %s11
    $region7: #{complex_conv_ktUnder_CAIPI_3_forward.1} parent=1 // loop_footer_branch
      %10 = sbr.rel target = $region3
    $region8: #{complex_conv_ktUnder_CAIPI_3_forward.1} parent=1 // loop_exit
      _

// kernel: custom-call.2
$region0: #{custom-call.2}
  %s0 = inlined_call_operand.vmem [shape: f32[2,8,6,8,8], index: 0, kind: input, shape index: {}]
  %s1 = inlined_call_operand.vmem [shape: f32[2,8,6,8,8], index: 1, kind: input, shape index: {}]
  %s2 = inlined_call_operand.hbm [shape: c64[2,8,6,8,8], index: 2, kind: output, shape index: {}]
  %s3 = scalar_lea.hbm %s2, 768
  $region1: #{custom-call.2} parent=0
    #allocation0 [shape = 's32[1]{0}', space=sflag, size = 0x4, scoped, tag = 'scoped memory for custom-call.2']
    %4 = vsyncpa [#allocation0], 0
    %s6 = sshll.u32 %s0, 4
    %s7 = int_to_ptr.vmem [resolvable:$true] %s6
    %s8 = sshll.u32 %s2, 4
    %s9 = int_to_ptr.hbm [resolvable:$true] %s8
    %11 = dma.vmem_to_hbm [thread:$0]  %s7, 12288, %s9, [#allocation0]
    %13 = dma.done [#allocation0], 12288
    %14 = vsyncpa [#allocation0], 1
  $region2: #{custom-call.2} parent=0
    #allocation1 [shape = 's32[1]{0}', space=sflag, size = 0x4, scoped, tag = 'scoped memory for custom-call.2']
    %15 = vsyncpa [#allocation1], 0
    %s17 = sshll.u32 %s1, 4
    %s18 = int_to_ptr.vmem [resolvable:$true] %s17
    %s19 = sshll.u32 %s3, 4
    %s20 = int_to_ptr.hbm [resolvable:$true] %s19
    %22 = dma.vmem_to_hbm [thread:$0]  %s18, 12288, %s20, [#allocation1]
    %24 = dma.done [#allocation1], 12288
    %25 = vsyncpa [#allocation1], 1

</llo_original>
